<compile_context>
chip_gen: v7x
topology: tpu7x:2x2x1
jax: 0.10.0
libtpu: 0.0.40
codegen_flags: <defaults>
</compile_context>

<pallas_src>
import jax
import jax.numpy as jnp
from jax.experimental import pallas as pl
from jax.experimental.pallas import tpu as pltpu

LANE = 128
SUBLANE = 8


def _round_up(x, m):
    return ((x + m - 1) // m) * m


# ----------------------------------------------------------------------------
# Fused kernel body: base-encoder glue + all heads, single grid step.
# ----------------------------------------------------------------------------
def _make_fused_kernel(seq_len, b_pad, v_pad):
    inv_s = 1.0 / float(seq_len)
    hi = jax.lax.Precision.HIGHEST

    def kernel(seq_ref, emb_ref, mix_ref, w1_ref, b1_ref, w2_ref, b2_ref,
               out_ref):
        # ---- base encoder glue (fused) ------------------------------------
        # mean-pool(gather(table, seq)) == (token-count matrix / S) @ table,
        # so the gather becomes a tiny MXU dot (no dynamic gather in Mosaic).
        seq = seq_ref[...]                                  # (B_pad, S_pad) int32
        viota = jax.lax.broadcasted_iota(jnp.int32, (b_pad, v_pad), 1)
        counts = jnp.zeros((b_pad, v_pad), jnp.float32)
        for s in range(seq_len):                            # static unroll, S tiny
            counts = counts + (seq[:, s:s + 1] == viota).astype(jnp.float32)
        pooled = jnp.dot(counts * inv_s, emb_ref[...],
                         preferred_element_type=jnp.float32, precision=hi)
        # tanh goes to the EUP slot (effectively free).
        x = jnp.tanh(jnp.dot(pooled, mix_ref[...],
                             preferred_element_type=jnp.float32, precision=hi))
        # self.dropout(layer_embeds): identity in eval-mode forward.

        # ---- all heads in two MXU dots ------------------------------------
        # W1 is every head concatenated along lanes; W2 is block-diagonal so
        # head i's hidden columns only reach head i's logit columns.
        h = jnp.maximum(
            jnp.dot(x, w1_ref[...], preferred_element_type=jnp.float32,
                    precision=hi) + b1_ref[...], 0.0)
        # nn.Dropout between ReLU and the 2nd Linear: identity in eval mode.
        y = jnp.dot(h, w2_ref[...], preferred_element_type=jnp.float32,
                    precision=hi) + b2_ref[...]
        out_ref[...] = y.astype(out_ref.dtype)

    return kernel


# ----------------------------------------------------------------------------
# One-time parameter layout transform: pad to (8,128) tiles, concatenate W1
# along lanes, build block-diagonal W2, replicate biases across the batch tile.
# ----------------------------------------------------------------------------
def pack_params(embed_table, layer_mix, heads, layer_idx, batch):
    V, D = embed_table.shape
    L = layer_mix.shape[0]
    li = layer_idx % L
    Hs = [int(h["w1"].shape[1]) for h in heads]
    Cs = [int(h["w2"].shape[1]) for h in heads]
    hoff = [0]
    for hh in Hs:
        hoff.append(hoff[-1] + hh)
    coff = [0]
    for cc in Cs:
        coff.append(coff[-1] + cc)

    b_pad = _round_up(max(batch, SUBLANE), SUBLANE)
    v_pad = _round_up(V, LANE)
    d_pad = _round_up(D, LANE)
    h_pad = _round_up(max(hoff[-1], 1), LANE)
    c_pad = _round_up(max(coff[-1], 1), LANE)

    emb = jnp.zeros((v_pad, d_pad), jnp.float32).at[:V, :D].set(embed_table)
    mix = jnp.zeros((d_pad, d_pad), jnp.float32).at[:D, :D].set(layer_mix[li])
    w1 = jnp.zeros((d_pad, h_pad), jnp.float32)
    b1 = jnp.zeros((b_pad, h_pad), jnp.float32)
    w2 = jnp.zeros((h_pad, c_pad), jnp.float32)
    b2 = jnp.zeros((b_pad, c_pad), jnp.float32)
    for i, hd in enumerate(heads):
        H, C = Hs[i], Cs[i]
        w1 = w1.at[:D, hoff[i]:hoff[i] + H].set(hd["w1"])
        b1 = b1.at[:, hoff[i]:hoff[i] + H].set(
            jnp.broadcast_to(hd["b1"], (b_pad, H)))
        w2 = w2.at[hoff[i]:hoff[i] + H, coff[i]:coff[i] + C].set(hd["w2"])
        b2 = b2.at[:, coff[i]:coff[i] + C].set(
            jnp.broadcast_to(hd["b2"], (b_pad, C)))

    packed = dict(emb=emb, mix=mix, w1=w1, b1=b1, w2=w2, b2=b2)
    meta = dict(b_pad=b_pad, v_pad=v_pad, d_pad=d_pad, h_pad=h_pad,
                c_pad=c_pad, coff=coff, Cs=Cs)
    return packed, meta


# ----------------------------------------------------------------------------
# Forward factory (static head metadata closed over).
# ----------------------------------------------------------------------------
def make_forward(meta, batch, seq_len, n_main):
    b_pad, v_pad = meta["b_pad"], meta["v_pad"]
    d_pad, h_pad, c_pad = meta["d_pad"], meta["h_pad"], meta["c_pad"]
    coff, Cs = meta["coff"], meta["Cs"]
    n_heads = len(Cs)
    s_pad = _round_up(max(seq_len, 1), LANE)
    kernel = _make_fused_kernel(seq_len, b_pad, v_pad)

    fused = pl.pallas_call(
        kernel,
        out_shape=jax.ShapeDtypeStruct((b_pad, c_pad), jnp.float32),
        grid=(1,),
        in_specs=[
            pl.BlockSpec((b_pad, s_pad), lambda i: (0, 0)),   # sequences
            pl.BlockSpec((v_pad, d_pad), lambda i: (0, 0)),   # embed table
            pl.BlockSpec((d_pad, d_pad), lambda i: (0, 0)),   # layer mix
            pl.BlockSpec((d_pad, h_pad), lambda i: (0, 0)),   # W1 (lane-concat)
            pl.BlockSpec((b_pad, h_pad), lambda i: (0, 0)),   # b1 (replicated)
            pl.BlockSpec((h_pad, c_pad), lambda i: (0, 0)),   # W2 (block-diag)
            pl.BlockSpec((b_pad, c_pad), lambda i: (0, 0)),   # b2 (replicated)
        ],
        out_specs=pl.BlockSpec((b_pad, c_pad), lambda i: (0, 0)),
        compiler_params=pltpu.CompilerParams(
            dimension_semantics=("arbitrary",)),
    )

    @jax.jit
    def forward(sequences, packed):
        # Single pad HLO for the only per-forward dynamic input.
        seq_pad = jnp.pad(sequences,
                          ((0, b_pad - batch), (0, s_pad - seq_len)))
        out = fused(seq_pad, packed["emb"], packed["mix"], packed["w1"],
                    packed["b1"], packed["w2"], packed["b2"])
        logits = [out[:batch, coff[i]:coff[i] + Cs[i]] for i in range(n_heads)]
        return logits[:n_main], logits[n_main:]

    return forward


# ----------------------------------------------------------------------------
# Deterministic parameter construction (mimics nn.Linear default init).
# Weights stored as (in, out) so the math is x @ W + b (== x @ weight.T + bias).
# ----------------------------------------------------------------------------
def init_linear(key, fan_in, fan_out):
    kw, kb = jax.random.split(key)
    bound = 1.0 / jnp.sqrt(fan_in)
    w = jax.random.uniform(kw, (fan_in, fan_out), jnp.float32, -bound, bound)
    b = jax.random.uniform(kb, (fan_out,), jnp.float32, -bound, bound)
    return w, b


def init_head(key, embed_dim, num_classes):
    k1, k2 = jax.random.split(key)
    hidden = embed_dim // 2
    w1, b1 = init_linear(k1, embed_dim, hidden)
    w2, b2 = init_linear(k2, hidden, num_classes)
    return dict(w1=w1, b1=b1, w2=w2, b2=b2)


if __name__ == "__main__":
    batch = 2
    seq_len = 8
    vocab = 32
    embed_dim = 32
    num_layers = 3
    num_classes_per_level = [4, 7]
    layer_idx = -1

    key = jax.random.PRNGKey(0)
    k_seq, k_emb, k_mix, k_heads = jax.random.split(key, 4)

    sequences = jax.random.randint(k_seq, (batch, seq_len), 0, vocab, jnp.int32)
    embed_table = jax.random.normal(k_emb, (vocab, embed_dim), jnp.float32) * 0.1
    layer_mix = jax.random.normal(k_mix, (num_layers, embed_dim, embed_dim),
                                  jnp.float32) * 0.1

    head_keys = jax.random.split(k_heads, 2 * len(num_classes_per_level))
    main_heads = [init_head(head_keys[2 * i], embed_dim, nc)
                  for i, nc in enumerate(num_classes_per_level)]
    aux_heads = [init_head(head_keys[2 * i + 1], embed_dim, nc)
                 for i, nc in enumerate(num_classes_per_level)]
    all_heads = main_heads + aux_heads

    # One-time layout transform (stack + pad + concat/block-diag weights).
    packed, meta = pack_params(embed_table, layer_mix, all_heads,
                               layer_idx, batch)

    forward = make_forward(meta, batch, seq_len,
                           n_main=len(num_classes_per_level))
    main_logits, aux_logits = forward(sequences, packed)
    for lg in main_logits + aux_logits:
        jax.block_until_ready(lg)

    # Pure-JAX reference with the original per-head parameters.
    hi = jax.lax.Precision.HIGHEST
    tok = embed_table[sequences]
    pooled = tok.mean(axis=1)
    x = jnp.tanh(jnp.matmul(pooled, layer_mix[layer_idx % num_layers],
                            precision=hi))
    for lg, h in zip(main_logits + aux_logits, all_heads):
        hid = jnp.maximum(jnp.matmul(x, h["w1"], precision=hi) + h["b1"], 0.0)
        ref = jnp.matmul(hid, h["w2"], precision=hi) + h["b2"]
        assert lg.shape == ref.shape, "shape mismatch vs reference"
        assert jnp.allclose(lg, ref, atol=1e-5), "mismatch vs reference"

    print("KERNEL_OK")
</pallas_src>

<mosaic_0001>
module attributes {stable_mosaic.version = 11 : i64} {
  func.func @kernel(%arg0: i32, %arg1: memref<8x128xi32, #tpu.memory_space<vmem>>, %arg2: memref<128x128xf32, #tpu.memory_space<vmem>>, %arg3: memref<128x128xf32, #tpu.memory_space<vmem>>, %arg4: memref<128x128xf32, #tpu.memory_space<vmem>>, %arg5: memref<8x128xf32, #tpu.memory_space<vmem>>, %arg6: memref<128x128xf32, #tpu.memory_space<vmem>>, %arg7: memref<8x128xf32, #tpu.memory_space<vmem>>, %arg8: memref<8x128xf32, #tpu.memory_space<vmem>>) attributes {dimension_semantics = [#tpu.dimension_semantics<arbitrary>], iteration_bounds = array<i64: 1>, scalar_prefetch = 0 : i64, scratch_operands = 0 : i64, tpu.core_type = #tpu.core_type<tc>, window_params = [{pipeline_mode = #tpu.pipeline_mode<synchronous>, transform_indices = @transform_0, window_bounds = array<i64: 8, 128>}, {pipeline_mode = #tpu.pipeline_mode<synchronous>, transform_indices = @transform_1, window_bounds = array<i64: 128, 128>}, {pipeline_mode = #tpu.pipeline_mode<synchronous>, transform_indices = @transform_2, window_bounds = array<i64: 128, 128>}, {pipeline_mode = #tpu.pipeline_mode<synchronous>, transform_indices = @transform_3, window_bounds = array<i64: 128, 128>}, {pipeline_mode = #tpu.pipeline_mode<synchronous>, transform_indices = @transform_4, window_bounds = array<i64: 8, 128>}, {pipeline_mode = #tpu.pipeline_mode<synchronous>, transform_indices = @transform_5, window_bounds = array<i64: 128, 128>}, {pipeline_mode = #tpu.pipeline_mode<synchronous>, transform_indices = @transform_6, window_bounds = array<i64: 8, 128>}, {pipeline_mode = #tpu.pipeline_mode<synchronous>, transform_indices = @transform_7, window_bounds = array<i64: 8, 128>}]} {
    %c0 = arith.constant 0 : index
    %c0_0 = arith.constant 0 : index
    %0 = vector.load %arg1[%c0, %c0_0] : memref<8x128xi32, #tpu.memory_space<vmem>>, vector<8x128xi32>
    %1 = tpu.iota {dimensions = array<i32: 1>} : vector<8x128xi32>
    %cst = arith.constant 0.000000e+00 : f32
    %2 = vector.broadcast %cst : f32 to vector<8x128xf32>
    %3 = vector.extract_strided_slice %0 {offsets = [0, 0], sizes = [8, 1], strides = [1, 1]} : vector<8x128xi32> to vector<8x1xi32>
    %4 = vector.broadcast %3 : vector<8x1xi32> to vector<8x128xi32>
    %5 = arith.cmpi eq, %4, %1 : vector<8x128xi32>
    %6 = arith.extui %5 : vector<8x128xi1> to vector<8x128xi32>
    %7 = arith.sitofp %6 : vector<8x128xi32> to vector<8x128xf32>
    %8 = arith.addf %2, %7 : vector<8x128xf32>
    %9 = vector.extract_strided_slice %0 {offsets = [0, 1], sizes = [8, 1], strides = [1, 1]} : vector<8x128xi32> to vector<8x1xi32>
    %10 = vector.broadcast %9 : vector<8x1xi32> to vector<8x128xi32>
    %11 = arith.cmpi eq, %10, %1 : vector<8x128xi32>
    %12 = arith.extui %11 : vector<8x128xi1> to vector<8x128xi32>
    %13 = arith.sitofp %12 : vector<8x128xi32> to vector<8x128xf32>
    %14 = arith.addf %8, %13 : vector<8x128xf32>
    %15 = vector.extract_strided_slice %0 {offsets = [0, 2], sizes = [8, 1], strides = [1, 1]} : vector<8x128xi32> to vector<8x1xi32>
    %16 = vector.broadcast %15 : vector<8x1xi32> to vector<8x128xi32>
    %17 = arith.cmpi eq, %16, %1 : vector<8x128xi32>
    %18 = arith.extui %17 : vector<8x128xi1> to vector<8x128xi32>
    %19 = arith.sitofp %18 : vector<8x128xi32> to vector<8x128xf32>
    %20 = arith.addf %14, %19 : vector<8x128xf32>
    %21 = vector.extract_strided_slice %0 {offsets = [0, 3], sizes = [8, 1], strides = [1, 1]} : vector<8x128xi32> to vector<8x1xi32>
    %22 = vector.broadcast %21 : vector<8x1xi32> to vector<8x128xi32>
    %23 = arith.cmpi eq, %22, %1 : vector<8x128xi32>
    %24 = arith.extui %23 : vector<8x128xi1> to vector<8x128xi32>
    %25 = arith.sitofp %24 : vector<8x128xi32> to vector<8x128xf32>
    %26 = arith.addf %20, %25 : vector<8x128xf32>
    %27 = vector.extract_strided_slice %0 {offsets = [0, 4], sizes = [8, 1], strides = [1, 1]} : vector<8x128xi32> to vector<8x1xi32>
    %28 = vector.broadcast %27 : vector<8x1xi32> to vector<8x128xi32>
    %29 = arith.cmpi eq, %28, %1 : vector<8x128xi32>
    %30 = arith.extui %29 : vector<8x128xi1> to vector<8x128xi32>
    %31 = arith.sitofp %30 : vector<8x128xi32> to vector<8x128xf32>
    %32 = arith.addf %26, %31 : vector<8x128xf32>
    %33 = vector.extract_strided_slice %0 {offsets = [0, 5], sizes = [8, 1], strides = [1, 1]} : vector<8x128xi32> to vector<8x1xi32>
    %34 = vector.broadcast %33 : vector<8x1xi32> to vector<8x128xi32>
    %35 = arith.cmpi eq, %34, %1 : vector<8x128xi32>
    %36 = arith.extui %35 : vector<8x128xi1> to vector<8x128xi32>
    %37 = arith.sitofp %36 : vector<8x128xi32> to vector<8x128xf32>
    %38 = arith.addf %32, %37 : vector<8x128xf32>
    %39 = vector.extract_strided_slice %0 {offsets = [0, 6], sizes = [8, 1], strides = [1, 1]} : vector<8x128xi32> to vector<8x1xi32>
    %40 = vector.broadcast %39 : vector<8x1xi32> to vector<8x128xi32>
    %41 = arith.cmpi eq, %40, %1 : vector<8x128xi32>
    %42 = arith.extui %41 : vector<8x128xi1> to vector<8x128xi32>
    %43 = arith.sitofp %42 : vector<8x128xi32> to vector<8x128xf32>
    %44 = arith.addf %38, %43 : vector<8x128xf32>
    %45 = vector.extract_strided_slice %0 {offsets = [0, 7], sizes = [8, 1], strides = [1, 1]} : vector<8x128xi32> to vector<8x1xi32>
    %46 = vector.broadcast %45 : vector<8x1xi32> to vector<8x128xi32>
    %47 = arith.cmpi eq, %46, %1 : vector<8x128xi32>
    %48 = arith.extui %47 : vector<8x128xi1> to vector<8x128xi32>
    %49 = arith.sitofp %48 : vector<8x128xi32> to vector<8x128xf32>
    %50 = arith.addf %44, %49 : vector<8x128xf32>
    %cst_1 = arith.constant 1.250000e-01 : f32
    %51 = vector.broadcast %cst_1 : f32 to vector<8x128xf32>
    %52 = arith.mulf %50, %51 : vector<8x128xf32>
    %c0_2 = arith.constant 0 : index
    %c0_3 = arith.constant 0 : index
    %53 = vector.load %arg2[%c0_2, %c0_3] : memref<128x128xf32, #tpu.memory_space<vmem>>, vector<128x128xf32>
    %cst_4 = arith.constant dense<0.000000e+00> : vector<8x128xf32>
    %54 = tpu.matmul %52, %53, %cst_4 {dimension_numbers = #tpu.dot_dimension_numbers<[1], [0], [0], [1], [0, 0, 1, 1], [], []>, precision = #tpu.contract_precision<fp32>} : vector<8x128xf32>, vector<128x128xf32>, vector<8x128xf32> -> vector<8x128xf32>
    %c0_5 = arith.constant 0 : index
    %c0_6 = arith.constant 0 : index
    %55 = vector.load %arg3[%c0_5, %c0_6] : memref<128x128xf32, #tpu.memory_space<vmem>>, vector<128x128xf32>
    %cst_7 = arith.constant dense<0.000000e+00> : vector<8x128xf32>
    %56 = tpu.matmul %54, %55, %cst_7 {dimension_numbers = #tpu.dot_dimension_numbers<[1], [0], [0], [1], [0, 0, 1, 1], [], []>, precision = #tpu.contract_precision<fp32>} : vector<8x128xf32>, vector<128x128xf32>, vector<8x128xf32> -> vector<8x128xf32>
    %57 = math.tanh %56 : vector<8x128xf32>
    %c0_8 = arith.constant 0 : index
    %c0_9 = arith.constant 0 : index
    %58 = vector.load %arg4[%c0_8, %c0_9] : memref<128x128xf32, #tpu.memory_space<vmem>>, vector<128x128xf32>
    %cst_10 = arith.constant dense<0.000000e+00> : vector<8x128xf32>
    %59 = tpu.matmul %57, %58, %cst_10 {dimension_numbers = #tpu.dot_dimension_numbers<[1], [0], [0], [1], [0, 0, 1, 1], [], []>, precision = #tpu.contract_precision<fp32>} : vector<8x128xf32>, vector<128x128xf32>, vector<8x128xf32> -> vector<8x128xf32>
    %c0_11 = arith.constant 0 : index
    %c0_12 = arith.constant 0 : index
    %60 = vector.load %arg5[%c0_11, %c0_12] : memref<8x128xf32, #tpu.memory_space<vmem>>, vector<8x128xf32>
    %61 = arith.addf %59, %60 : vector<8x128xf32>
    %cst_13 = arith.constant 0.000000e+00 : f32
    %62 = vector.broadcast %cst_13 : f32 to vector<8x128xf32>
    %63 = arith.maximumf %61, %62 : vector<8x128xf32>
    %c0_14 = arith.constant 0 : index
    %c0_15 = arith.constant 0 : index
    %64 = vector.load %arg6[%c0_14, %c0_15] : memref<128x128xf32, #tpu.memory_space<vmem>>, vector<128x128xf32>
    %cst_16 = arith.constant dense<0.000000e+00> : vector<8x128xf32>
    %65 = tpu.matmul %63, %64, %cst_16 {dimension_numbers = #tpu.dot_dimension_numbers<[1], [0], [0], [1], [0, 0, 1, 1], [], []>, precision = #tpu.contract_precision<fp32>} : vector<8x128xf32>, vector<128x128xf32>, vector<8x128xf32> -> vector<8x128xf32>
    %c0_17 = arith.constant 0 : index
    %c0_18 = arith.constant 0 : index
    %66 = vector.load %arg7[%c0_17, %c0_18] : memref<8x128xf32, #tpu.memory_space<vmem>>, vector<8x128xf32>
    %67 = arith.addf %65, %66 : vector<8x128xf32>
    %c0_19 = arith.constant 0 : index
    %c0_20 = arith.constant 0 : index
    %68 = vector.load %arg8[%c0_19, %c0_20] : memref<8x128xf32, #tpu.memory_space<vmem>>, vector<8x128xf32>
    tpu.vector_store %arg8[%c0_19, %c0_20], %67 {strides = array<i32>} : memref<8x128xf32, #tpu.memory_space<vmem>>, vector<8x128xf32>,
    return
  }
  func.func @transform_0(%arg0: i32) -> (i32, i32) {
    %c0_i32 = arith.constant 0 : i32
    %c0_i32_0 = arith.constant 0 : i32
    %c0_i32_1 = arith.constant 0 : i32
    return %c0_i32, %c0_i32_0 : i32, i32
  }
  func.func @transform_1(%arg0: i32) -> (i32, i32) {
    %c0_i32 = arith.constant 0 : i32
    %c0_i32_0 = arith.constant 0 : i32
    %c0_i32_1 = arith.constant 0 : i32
    return %c0_i32, %c0_i32_0 : i32, i32
  }
  func.func @transform_2(%arg0: i32) -> (i32, i32) {
    %c0_i32 = arith.constant 0 : i32
    %c0_i32_0 = arith.constant 0 : i32
    %c0_i32_1 = arith.constant 0 : i32
    return %c0_i32, %c0_i32_0 : i32, i32
  }
  func.func @transform_3(%arg0: i32) -> (i32, i32) {
    %c0_i32 = arith.constant 0 : i32
    %c0_i32_0 = arith.constant 0 : i32
    %c0_i32_1 = arith.constant 0 : i32
    return %c0_i32, %c0_i32_0 : i32, i32
  }
  func.func @transform_4(%arg0: i32) -> (i32, i32) {
    %c0_i32 = arith.constant 0 : i32
    %c0_i32_0 = arith.constant 0 : i32
    %c0_i32_1 = arith.constant 0 : i32
    return %c0_i32, %c0_i32_0 : i32, i32
  }
  func.func @transform_5(%arg0: i32) -> (i32, i32) {
    %c0_i32 = arith.constant 0 : i32
    %c0_i32_0 = arith.constant 0 : i32
    %c0_i32_1 = arith.constant 0 : i32
    return %c0_i32, %c0_i32_0 : i32, i32
  }
  func.func @transform_6(%arg0: i32) -> (i32, i32) {
    %c0_i32 = arith.constant 0 : i32
    %c0_i32_0 = arith.constant 0 : i32
    %c0_i32_1 = arith.constant 0 : i32
    return %c0_i32, %c0_i32_0 : i32, i32
  }
  func.func @transform_7(%arg0: i32) -> (i32, i32) {
    %c0_i32 = arith.constant 0 : i32
    %c0_i32_0 = arith.constant 0 : i32
    %c0_i32_1 = arith.constant 0 : i32
    return %c0_i32, %c0_i32_0 : i32, i32
  }
}

</mosaic_0001>

<llo_original>
// kernel: forward.1
$region0: #{forward.1}
  #allocation0 [shape = 'u32[]', space=smem, size = 0x4, offset = 0x4, fixed_abs, tag = 'smem constant byte address 0x4 - core index']
  #allocation1 [shape = 'u32[144,128]{1,0:T(1,128)}', space=vmem, size = 0x12000, scoped, tag = 'internal scratch']
  %s0 = inlined_call_operand.vmem [shape: s32[8,128], index: 0, kind: input, shape index: {}]
  %s1 = inlined_call_operand.hbm [shape: f32[128,128], index: 1, kind: input, shape index: {}]
  %s2 = inlined_call_operand.hbm [shape: f32[128,128], index: 2, kind: input, shape index: {}]
  %s3 = inlined_call_operand.hbm [shape: f32[128,128], index: 3, kind: input, shape index: {}]
  %s4 = inlined_call_operand.vmem [shape: f32[8,128], index: 4, kind: input, shape index: {}]
  %s5 = inlined_call_operand.hbm [shape: f32[128,128], index: 5, kind: input, shape index: {}]
  %s6 = inlined_call_operand.vmem [shape: f32[8,128], index: 6, kind: input, shape index: {}]
  %s7 = inlined_call_operand.vmem [shape: f32[8,128], index: 7, kind: output, shape index: {}]
  %s8 = sld [smem:[#allocation0]]
  $region54: #{forward.1} parent=0
    _
  %s10 = ssub.s32 1, %s8
  %s11 = scalar_select 0, %s10, %s8
  $region1: #{forward.1} parent=0
    #allocation2 [shape = 'u8[65536]{0}', space=vmem, size = 0x10000, scoped, tag = 'input window, operand 1, single buffered']
    #allocation3 [shape = 's32[1]{0}', space=sflag, size = 0x4, scoped, tag = 'scoped memory for forward.1']
    #allocation4 [shape = 'u8[65536]{0}', space=vmem, size = 0x10000, scoped, tag = 'input window, operand 2, single buffered']
    #allocation5 [shape = 's32[1]{0}', space=sflag, size = 0x4, scoped, tag = 'scoped memory for forward.1']
    #allocation6 [shape = 'u8[65536]{0}', space=vmem, size = 0x10000, scoped, tag = 'input window, operand 3, single buffered']
    #allocation7 [shape = 'u8[65536]{0}', space=vmem, size = 0x10000, scoped, tag = 'input window, operand 5, single buffered']
    #allocation8 [shape = 's32[1]{0}', space=sflag, size = 0x4, scoped, tag = 'scoped memory for forward.1']
    %12 = vsyncpa [#allocation3], 0
    %13 = vsyncpa [#allocation5], 0
    %14 = vsyncpa [#allocation8], 0
    // Predicated region
    $region2: #{forward.1} parent=1 // pred_check
      _
    $region3: #{forward.1} parent=1 // pred_check_branch
      %16 = sbr.rel (0) target = $region5
    $region4: #{forward.1} parent=1 // pred_region
      _
    $region5: #{forward.1} parent=1 // pred_fallthru
      _
    // Predicated region
    $region6: #{forward.1} parent=1 // pred_check
      _
    $region7: #{forward.1} parent=1 // pred_check_branch
      %18 = sbr.rel (0) target = $region9
    $region8: #{forward.1} parent=1 // pred_region
      %s20 = ssub.s32 2048, 2048
      %21 = vsyncadd [#allocation3], %s20
      %s22 = sshll.u32 [#allocation2], 4
      %s23 = int_to_ptr.vmem [resolvable:$true] %s22
      %28 = dma.hbm_to_vmem [thread:$0]  %s1, 2048, %s23, [#allocation3], 128, 128, 8
    $region9: #{forward.1} parent=1 // pred_fallthru
      _
    // Predicated region
    $region10: #{forward.1} parent=1 // pred_check
      _
    $region11: #{forward.1} parent=1 // pred_check_branch
      %30 = sbr.rel (0) target = $region13
    $region12: #{forward.1} parent=1 // pred_region
      %s32 = ssub.s32 2048, 2048
      %33 = vsyncadd [#allocation5], %s32
      %s34 = sshll.u32 [#allocation4], 4
      %s35 = int_to_ptr.vmem [resolvable:$true] %s34
      %40 = dma.hbm_to_vmem [thread:$0]  %s2, 2048, %s35, [#allocation5], 128, 128, 8
    $region13: #{forward.1} parent=1 // pred_fallthru
      _
    // Predicated region
    $region14: #{forward.1} parent=1 // pred_check
      _
    $region15: #{forward.1} parent=1 // pred_check_branch
      %42 = sbr.rel (0) target = $region17
    $region16: #{forward.1} parent=1 // pred_region
      %s44 = ssub.s32 2048, 2048
      %45 = vsyncadd [#allocation5], %s44
      %s46 = sshll.u32 [#allocation6], 4
      %s47 = int_to_ptr.vmem [resolvable:$true] %s46
      %52 = dma.hbm_to_vmem [thread:$0]  %s3, 2048, %s47, [#allocation5], 128, 128, 8
    $region17: #{forward.1} parent=1 // pred_fallthru
      _
    // Predicated region
    $region18: #{forward.1} parent=1 // pred_check
      _
    $region19: #{forward.1} parent=1 // pred_check_branch
      %54 = sbr.rel (0) target = $region21
    $region20: #{forward.1} parent=1 // pred_region
      _
    $region21: #{forward.1} parent=1 // pred_fallthru
      _
    // Predicated region
    $region22: #{forward.1} parent=1 // pred_check
      _
    $region23: #{forward.1} parent=1 // pred_check_branch
      %56 = sbr.rel (0) target = $region25
    $region24: #{forward.1} parent=1 // pred_region
      %s58 = ssub.s32 2048, 2048
      %59 = vsyncadd [#allocation8], %s58
      %s60 = sshll.u32 [#allocation7], 4
      %s61 = int_to_ptr.vmem [resolvable:$true] %s60
      %66 = dma.hbm_to_vmem [thread:$0]  %s5, 2048, %s61, [#allocation8], 128, 128, 8
    $region25: #{forward.1} parent=1 // pred_fallthru
      _
    // Predicated region
    $region26: #{forward.1} parent=1 // pred_check
      _
    $region27: #{forward.1} parent=1 // pred_check_branch
      %68 = sbr.rel (0) target = $region29
    $region28: #{forward.1} parent=1 // pred_region
      _
    $region29: #{forward.1} parent=1 // pred_fallthru
      _
    // Predicated region
    $region30: #{forward.1} parent=1 // pred_check
      _
    $region31: #{forward.1} parent=1 // pred_check_branch
      %70 = sbr.rel (0) target = $region33
    $region32: #{forward.1} parent=1 // pred_region
      %71 = dma.done [#allocation3], 2048
    $region33: #{forward.1} parent=1 // pred_fallthru
      _
    // Predicated region
    $region34: #{forward.1} parent=1 // pred_check
      _
    $region35: #{forward.1} parent=1 // pred_check_branch
      %73 = sbr.rel (0) target = $region37
    $region36: #{forward.1} parent=1 // pred_region
      %74 = dma.done [#allocation5], 2048
    $region37: #{forward.1} parent=1 // pred_fallthru
      _
    // Predicated region
    $region38: #{forward.1} parent=1 // pred_check
      _
    $region39: #{forward.1} parent=1 // pred_check_branch
      %76 = sbr.rel (0) target = $region41
    $region40: #{forward.1} parent=1 // pred_region
      %77 = dma.done [#allocation5], 2048
    $region41: #{forward.1} parent=1 // pred_fallthru
      _
    // Predicated region
    $region42: #{forward.1} parent=1 // pred_check
      _
    $region43: #{forward.1} parent=1 // pred_check_branch
      %79 = sbr.rel (0) target = $region45
    $region44: #{forward.1} parent=1 // pred_region
      %80 = dma.done [#allocation8], 2048
    $region45: #{forward.1} parent=1 // pred_fallthru
      _
    %v81 = vld [vmem:[%s0] sm:$0xff]
    %v82 = vlaneseq
    %v83 = vand.u32 %v82, 127
    %84 = vset.pattern.permute.xlu0 0
    %85 = vperm.xlu0 %84, %v81
    %v86 = vpop.permute.xlu0 %85
    %vm87 = vcmp.eq.s32.totalorder %v86, %v83
    %v88 = vsel %vm87, 1, 0
    %v89 = vcvt.s32.f32 %v88
    %v90 = vadd.f32 %v89, 0.0
    %91 = vset.pattern.permute.xlu0 1
    %92 = vperm.xlu0 %91, %v81
    %v93 = vpop.permute.xlu0 %92
    %vm94 = vcmp.eq.s32.totalorder %v93, %v83
    %v95 = vsel %vm94, 1, 0
    %v96 = vcvt.s32.f32 %v95
    %v97 = vadd.f32 %v90, %v96
    %98 = vset.pattern.permute.xlu0 2
    %99 = vperm.xlu0 %98, %v81
    %v100 = vpop.permute.xlu0 %99
    %vm101 = vcmp.eq.s32.totalorder %v100, %v83
    %v102 = vsel %vm101, 1, 0
    %v103 = vcvt.s32.f32 %v102
    %v104 = vadd.f32 %v97, %v103
    %105 = vset.pattern.permute.xlu0 3
    %106 = vperm.xlu0 %105, %v81
    %v107 = vpop.permute.xlu0 %106
    %vm108 = vcmp.eq.s32.totalorder %v107, %v83
    %v109 = vsel %vm108, 1, 0
    %v110 = vcvt.s32.f32 %v109
    %v111 = vadd.f32 %v104, %v110
    %112 = vset.pattern.permute.xlu0 4
    %113 = vperm.xlu0 %112, %v81
    %v114 = vpop.permute.xlu0 %113
    %vm115 = vcmp.eq.s32.totalorder %v114, %v83
    %v116 = vsel %vm115, 1, 0
    %v117 = vcvt.s32.f32 %v116
    %v118 = vadd.f32 %v111, %v117
    %119 = vset.pattern.permute.xlu0 5
    %120 = vperm.xlu0 %119, %v81
    %v121 = vpop.permute.xlu0 %120
    %vm122 = vcmp.eq.s32.totalorder %v121, %v83
    %v123 = vsel %vm122, 1, 0
    %v124 = vcvt.s32.f32 %v123
    %v125 = vadd.f32 %v118, %v124
    %126 = vset.pattern.permute.xlu0 6
    %127 = vperm.xlu0 %126, %v81
    %v128 = vpop.permute.xlu0 %127
    %vm129 = vcmp.eq.s32.totalorder %v128, %v83
    %v130 = vsel %vm129, 1, 0
    %v131 = vcvt.s32.f32 %v130
    %v132 = vadd.f32 %v125, %v131
    %133 = vset.pattern.permute.xlu0 7
    %134 = vperm.xlu0 %133, %v81
    %v135 = vpop.permute.xlu0 %134
    %vm136 = vcmp.eq.s32.totalorder %v135, %v83
    %v137 = vsel %vm136, 1, 0
    %v138 = vcvt.s32.f32 %v137
    %v139 = vadd.f32 %v132, %v138
    %v140 = vmul.f32 %v139, 0.125
    %v141 = vld [vmem:[#allocation2] sm:$0xff]
    %v142 = vld [vmem:[#allocation2 + $0x8] sm:$0xff]
    %v143 = vld [vmem:[#allocation2 + $0x10] sm:$0xff]
    %v144 = vld [vmem:[#allocation2 + $0x18] sm:$0xff]
    %v145 = vld [vmem:[#allocation2 + $0x20] sm:$0xff]
    %v146 = vld [vmem:[#allocation2 + $0x28] sm:$0xff]
    %v147 = vld [vmem:[#allocation2 + $0x30] sm:$0xff]
    %v148 = vld [vmem:[#allocation2 + $0x38] sm:$0xff]
    %v149 = vld [vmem:[#allocation2 + $0x40] sm:$0xff]
    %v150 = vld [vmem:[#allocation2 + $0x48] sm:$0xff]
    %v151 = vld [vmem:[#allocation2 + $0x50] sm:$0xff]
    %v152 = vld [vmem:[#allocation2 + $0x58] sm:$0xff]
    %v153 = vld [vmem:[#allocation2 + $0x60] sm:$0xff]
    %v154 = vld [vmem:[#allocation2 + $0x68] sm:$0xff]
    %v155 = vld [vmem:[#allocation2 + $0x70] sm:$0xff]
    %v156 = vld [vmem:[#allocation2 + $0x78] sm:$0xff]
    %157 = vmatprep.subr.mxu0 0.0
    %v158 = vand.u32 %v141, 4294901760
    %159 = vmatpush1.msra.mxu0 %v158
    %160 = vmatprep.subr.mxu0 0.0
    %v161 = vand.u32 %v142, 4294901760
    %162 = vmatpush1.msra.mxu0 %v161
    %163 = vmatprep.subr.mxu0 0.0
    %v164 = vand.u32 %v143, 4294901760
    %165 = vmatpush1.msra.mxu0 %v164
    %166 = vmatprep.subr.mxu0 0.0
    %v167 = vand.u32 %v144, 4294901760
    %168 = vmatpush1.msra.mxu0 %v167
    %169 = vmatprep.subr.mxu0 0.0
    %v170 = vand.u32 %v145, 4294901760
    %171 = vmatpush1.msra.mxu0 %v170
    %172 = vmatprep.subr.mxu0 0.0
    %v173 = vand.u32 %v146, 4294901760
    %174 = vmatpush1.msra.mxu0 %v173
    %175 = vmatprep.subr.mxu0 0.0
    %v176 = vand.u32 %v147, 4294901760
    %177 = vmatpush1.msra.mxu0 %v176
    %178 = vmatprep.subr.mxu0 0.0
    %v179 = vand.u32 %v148, 4294901760
    %180 = vmatpush1.msra.mxu0 %v179
    %181 = vmatprep.subr.mxu0 0.0
    %v182 = vand.u32 %v149, 4294901760
    %183 = vmatpush1.msra.mxu0 %v182
    %184 = vmatprep.subr.mxu0 0.0
    %v185 = vand.u32 %v150, 4294901760
    %186 = vmatpush1.msra.mxu0 %v185
    %187 = vmatprep.subr.mxu0 0.0
    %v188 = vand.u32 %v151, 4294901760
    %189 = vmatpush1.msra.mxu0 %v188
    %190 = vmatprep.subr.mxu0 0.0
    %v191 = vand.u32 %v152, 4294901760
    %192 = vmatpush1.msra.mxu0 %v191
    %193 = vmatprep.subr.mxu0 0.0
    %v194 = vand.u32 %v153, 4294901760
    %195 = vmatpush1.msra.mxu0 %v194
    %196 = vmatprep.subr.mxu0 0.0
    %v197 = vand.u32 %v154, 4294901760
    %198 = vmatpush1.msra.mxu0 %v197
    %199 = vmatprep.subr.mxu0 0.0
    %v200 = vand.u32 %v155, 4294901760
    %201 = vmatpush1.msra.mxu0 %v200
    %202 = vmatprep.subr.mxu0 0.0
    %v203 = vand.u32 %v156, 4294901760
    %204 = vmatpush1.msra.mxu0 %v203
    %205 = vmatprep.subr.mxu0 0.0
    %206 = vmatpush1.msra.mxu0 0.0
    %207 = vmatprep.subr.mxu0 0.0
    %208 = vmatpush1.msra.mxu0 0.0
    %209 = vmatprep.subr.mxu0 0.0
    %210 = vmatpush1.msra.mxu0 0.0
    %211 = vmatprep.subr.mxu0 0.0
    %212 = vmatpush1.msra.mxu0 0.0
    %213 = vmatprep.subr.mxu0 0.0
    %214 = vmatpush1.msra.mxu0 0.0
    %215 = vmatprep.subr.mxu0 0.0
    %216 = vmatpush1.msra.mxu0 0.0
    %217 = vmatprep.subr.mxu0 0.0
    %218 = vmatpush1.msra.mxu0 0.0
    %219 = vmatprep.subr.mxu0 0.0
    %220 = vmatpush1.msra.mxu0 0.0
    %221 = vmatprep.subr.mxu0 0.0
    %222 = vmatpush1.msra.mxu0 0.0
    %223 = vmatprep.subr.mxu0 0.0
    %224 = vmatpush1.msra.mxu0 0.0
    %225 = vmatprep.subr.mxu0 0.0
    %226 = vmatpush1.msra.mxu0 0.0
    %227 = vmatprep.subr.mxu0 0.0
    %228 = vmatpush1.msra.mxu0 0.0
    %229 = vmatprep.subr.mxu0 0.0
    %230 = vmatpush1.msra.mxu0 0.0
    %231 = vmatprep.subr.mxu0 0.0
    %232 = vmatpush1.msra.mxu0 0.0
    %233 = vmatprep.subr.mxu0 0.0
    %234 = vmatpush1.msra.mxu0 0.0
    %235 = vmatprep.subr.mxu0 0.0
    %236 = vmatpush1.msra.mxu0 0.0
    %237 = vmatprep.mubr.f32.mxu0 0.0
    %v238 = vand.u32 %v140, 4294901760
    %v239 = vsub.f32 %v140, %v238
    %v240 = vand.u32 %v239, 4294901760
    %v241 = vsub.f32 %v239, %v240
    %v242 = vand.u32 %v241, 4294901760
    %243 = vmatmul.mubr.f32.gmra.mrb[0].mxu0 %v242
    %v244 = vpop.f32.mrb[0].mxu0
    %v245 = vadd.f32 0.0, %v244
    %v246 = vpop.f32.mrb[0].mxu0
    %247 = vdwg.mxu0
    %248 = vmatprep.subr.mxu0 0.0
    %v249 = vand.u32 %v141, 4294901760
    %v250 = vsub.f32 %v141, %v249
    %v251 = vand.u32 %v250, 4294901760
    %v252 = vsub.f32 %v250, %v251
    %v253 = vand.u32 %v252, 4294901760
    %254 = vmatpush1.msra.mxu0 %v253
    %255 = vmatprep.subr.mxu0 0.0
    %v256 = vand.u32 %v142, 4294901760
    %v257 = vsub.f32 %v142, %v256
    %v258 = vand.u32 %v257, 4294901760
    %v259 = vsub.f32 %v257, %v258
    %v260 = vand.u32 %v259, 4294901760
    %261 = vmatpush1.msra.mxu0 %v260
    %262 = vmatprep.subr.mxu0 0.0
    %v263 = vand.u32 %v143, 4294901760
    %v264 = vsub.f32 %v143, %v263
    %v265 = vand.u32 %v264, 4294901760
    %v266 = vsub.f32 %v264, %v265
    %v267 = vand.u32 %v266, 4294901760
    %268 = vmatpush1.msra.mxu0 %v267
    %269 = vmatprep.subr.mxu0 0.0
    %v270 = vand.u32 %v144, 4294901760
    %v271 = vsub.f32 %v144, %v270
    %v272 = vand.u32 %v271, 4294901760
    %v273 = vsub.f32 %v271, %v272
    %v274 = vand.u32 %v273, 4294901760
    %275 = vmatpush1.msra.mxu0 %v274
    %276 = vmatprep.subr.mxu0 0.0
    %v277 = vand.u32 %v145, 4294901760
    %v278 = vsub.f32 %v145, %v277
    %v279 = vand.u32 %v278, 4294901760
    %v280 = vsub.f32 %v278, %v279
    %v281 = vand.u32 %v280, 4294901760
    %282 = vmatpush1.msra.mxu0 %v281
    %283 = vmatprep.subr.mxu0 0.0
    %v284 = vand.u32 %v146, 4294901760
    %v285 = vsub.f32 %v146, %v284
    %v286 = vand.u32 %v285, 4294901760
    %v287 = vsub.f32 %v285, %v286
    %v288 = vand.u32 %v287, 4294901760
    %289 = vmatpush1.msra.mxu0 %v288
    %290 = vmatprep.subr.mxu0 0.0
    %v291 = vand.u32 %v147, 4294901760
    %v292 = vsub.f32 %v147, %v291
    %v293 = vand.u32 %v292, 4294901760
    %v294 = vsub.f32 %v292, %v293
    %v295 = vand.u32 %v294, 4294901760
    %296 = vmatpush1.msra.mxu0 %v295
    %297 = vmatprep.subr.mxu0 0.0
    %v298 = vand.u32 %v148, 4294901760
    %v299 = vsub.f32 %v148, %v298
    %v300 = vand.u32 %v299, 4294901760
    %v301 = vsub.f32 %v299, %v300
    %v302 = vand.u32 %v301, 4294901760
    %303 = vmatpush1.msra.mxu0 %v302
    %304 = vmatprep.subr.mxu0 0.0
    %v305 = vand.u32 %v149, 4294901760
    %v306 = vsub.f32 %v149, %v305
    %v307 = vand.u32 %v306, 4294901760
    %v308 = vsub.f32 %v306, %v307
    %v309 = vand.u32 %v308, 4294901760
    %310 = vmatpush1.msra.mxu0 %v309
    %311 = vmatprep.subr.mxu0 0.0
    %v312 = vand.u32 %v150, 4294901760
    %v313 = vsub.f32 %v150, %v312
    %v314 = vand.u32 %v313, 4294901760
    %v315 = vsub.f32 %v313, %v314
    %v316 = vand.u32 %v315, 4294901760
    %317 = vmatpush1.msra.mxu0 %v316
    %318 = vmatprep.subr.mxu0 0.0
    %v319 = vand.u32 %v151, 4294901760
    %v320 = vsub.f32 %v151, %v319
    %v321 = vand.u32 %v320, 4294901760
    %v322 = vsub.f32 %v320, %v321
    %v323 = vand.u32 %v322, 4294901760
    %324 = vmatpush1.msra.mxu0 %v323
    %325 = vmatprep.subr.mxu0 0.0
    %v326 = vand.u32 %v152, 4294901760
    %v327 = vsub.f32 %v152, %v326
    %v328 = vand.u32 %v327, 4294901760
    %v329 = vsub.f32 %v327, %v328
    %v330 = vand.u32 %v329, 4294901760
    %331 = vmatpush1.msra.mxu0 %v330
    %332 = vmatprep.subr.mxu0 0.0
    %v333 = vand.u32 %v153, 4294901760
    %v334 = vsub.f32 %v153, %v333
    %v335 = vand.u32 %v334, 4294901760
    %v336 = vsub.f32 %v334, %v335
    %v337 = vand.u32 %v336, 4294901760
    %338 = vmatpush1.msra.mxu0 %v337
    %339 = vmatprep.subr.mxu0 0.0
    %v340 = vand.u32 %v154, 4294901760
    %v341 = vsub.f32 %v154, %v340
    %v342 = vand.u32 %v341, 4294901760
    %v343 = vsub.f32 %v341, %v342
    %v344 = vand.u32 %v343, 4294901760
    %345 = vmatpush1.msra.mxu0 %v344
    %346 = vmatprep.subr.mxu0 0.0
    %v347 = vand.u32 %v155, 4294901760
    %v348 = vsub.f32 %v155, %v347
    %v349 = vand.u32 %v348, 4294901760
    %v350 = vsub.f32 %v348, %v349
    %v351 = vand.u32 %v350, 4294901760
    %352 = vmatpush1.msra.mxu0 %v351
    %353 = vmatprep.subr.mxu0 0.0
    %v354 = vand.u32 %v156, 4294901760
    %v355 = vsub.f32 %v156, %v354
    %v356 = vand.u32 %v355, 4294901760
    %v357 = vsub.f32 %v355, %v356
    %v358 = vand.u32 %v357, 4294901760
    %359 = vmatpush1.msra.mxu0 %v358
    %360 = vmatprep.subr.mxu0 0.0
    %361 = vmatpush1.msra.mxu0 0.0
    %362 = vmatprep.subr.mxu0 0.0
    %363 = vmatpush1.msra.mxu0 0.0
    %364 = vmatprep.subr.mxu0 0.0
    %365 = vmatpush1.msra.mxu0 0.0
    %366 = vmatprep.subr.mxu0 0.0
    %367 = vmatpush1.msra.mxu0 0.0
    %368 = vmatprep.subr.mxu0 0.0
    %369 = vmatpush1.msra.mxu0 0.0
    %370 = vmatprep.subr.mxu0 0.0
    %371 = vmatpush1.msra.mxu0 0.0
    %372 = vmatprep.subr.mxu0 0.0
    %373 = vmatpush1.msra.mxu0 0.0
    %374 = vmatprep.subr.mxu0 0.0
    %375 = vmatpush1.msra.mxu0 0.0
    %376 = vmatprep.subr.mxu0 0.0
    %377 = vmatpush1.msra.mxu0 0.0
    %378 = vmatprep.subr.mxu0 0.0
    %379 = vmatpush1.msra.mxu0 0.0
    %380 = vmatprep.subr.mxu0 0.0
    %381 = vmatpush1.msra.mxu0 0.0
    %382 = vmatprep.subr.mxu0 0.0
    %383 = vmatpush1.msra.mxu0 0.0
    %384 = vmatprep.subr.mxu0 0.0
    %385 = vmatpush1.msra.mxu0 0.0
    %386 = vmatprep.subr.mxu0 0.0
    %387 = vmatpush1.msra.mxu0 0.0
    %388 = vmatprep.subr.mxu0 0.0
    %389 = vmatpush1.msra.mxu0 0.0
    %390 = vmatprep.subr.mxu0 0.0
    %391 = vmatpush1.msra.mxu0 0.0
    %392 = vmatprep.mubr.f32.mxu0 0.0
    %v393 = vand.u32 %v140, 4294901760
    %394 = vmatmul.mubr.f32.gmra.mrb[0].mxu0 %v393
    %v395 = vpop.f32.mrb[0].mxu0
    %v396 = vadd.f32 %v245, %v395
    %v397 = vpop.f32.mrb[0].mxu0
    %398 = vdwg.mxu0
    %399 = vmatprep.subr.mxu0 0.0
    %v400 = vand.u32 %v141, 4294901760
    %v401 = vsub.f32 %v141, %v400
    %402 = vmatpush1.msra.mxu0 %v401
    %403 = vmatprep.subr.mxu0 0.0
    %v404 = vand.u32 %v142, 4294901760
    %v405 = vsub.f32 %v142, %v404
    %406 = vmatpush1.msra.mxu0 %v405
    %407 = vmatprep.subr.mxu0 0.0
    %v408 = vand.u32 %v143, 4294901760
    %v409 = vsub.f32 %v143, %v408
    %410 = vmatpush1.msra.mxu0 %v409
    %411 = vmatprep.subr.mxu0 0.0
    %v412 = vand.u32 %v144, 4294901760
    %v413 = vsub.f32 %v144, %v412
    %414 = vmatpush1.msra.mxu0 %v413
    %415 = vmatprep.subr.mxu0 0.0
    %v416 = vand.u32 %v145, 4294901760
    %v417 = vsub.f32 %v145, %v416
    %418 = vmatpush1.msra.mxu0 %v417
    %419 = vmatprep.subr.mxu0 0.0
    %v420 = vand.u32 %v146, 4294901760
    %v421 = vsub.f32 %v146, %v420
    %422 = vmatpush1.msra.mxu0 %v421
    %423 = vmatprep.subr.mxu0 0.0
    %v424 = vand.u32 %v147, 4294901760
    %v425 = vsub.f32 %v147, %v424
    %426 = vmatpush1.msra.mxu0 %v425
    %427 = vmatprep.subr.mxu0 0.0
    %v428 = vand.u32 %v148, 4294901760
    %v429 = vsub.f32 %v148, %v428
    %430 = vmatpush1.msra.mxu0 %v429
    %431 = vmatprep.subr.mxu0 0.0
    %v432 = vand.u32 %v149, 4294901760
    %v433 = vsub.f32 %v149, %v432
    %434 = vmatpush1.msra.mxu0 %v433
    %435 = vmatprep.subr.mxu0 0.0
    %v436 = vand.u32 %v150, 4294901760
    %v437 = vsub.f32 %v150, %v436
    %438 = vmatpush1.msra.mxu0 %v437
    %439 = vmatprep.subr.mxu0 0.0
    %v440 = vand.u32 %v151, 4294901760
    %v441 = vsub.f32 %v151, %v440
    %442 = vmatpush1.msra.mxu0 %v441
    %443 = vmatprep.subr.mxu0 0.0
    %v444 = vand.u32 %v152, 4294901760
    %v445 = vsub.f32 %v152, %v444
    %446 = vmatpush1.msra.mxu0 %v445
    %447 = vmatprep.subr.mxu0 0.0
    %v448 = vand.u32 %v153, 4294901760
    %v449 = vsub.f32 %v153, %v448
    %450 = vmatpush1.msra.mxu0 %v449
    %451 = vmatprep.subr.mxu0 0.0
    %v452 = vand.u32 %v154, 4294901760
    %v453 = vsub.f32 %v154, %v452
    %454 = vmatpush1.msra.mxu0 %v453
    %455 = vmatprep.subr.mxu0 0.0
    %v456 = vand.u32 %v155, 4294901760
    %v457 = vsub.f32 %v155, %v456
    %458 = vmatpush1.msra.mxu0 %v457
    %459 = vmatprep.subr.mxu0 0.0
    %v460 = vand.u32 %v156, 4294901760
    %v461 = vsub.f32 %v156, %v460
    %462 = vmatpush1.msra.mxu0 %v461
    %463 = vmatprep.subr.mxu0 0.0
    %464 = vmatpush1.msra.mxu0 0.0
    %465 = vmatprep.subr.mxu0 0.0
    %466 = vmatpush1.msra.mxu0 0.0
    %467 = vmatprep.subr.mxu0 0.0
    %468 = vmatpush1.msra.mxu0 0.0
    %469 = vmatprep.subr.mxu0 0.0
    %470 = vmatpush1.msra.mxu0 0.0
    %471 = vmatprep.subr.mxu0 0.0
    %472 = vmatpush1.msra.mxu0 0.0
    %473 = vmatprep.subr.mxu0 0.0
    %474 = vmatpush1.msra.mxu0 0.0
    %475 = vmatprep.subr.mxu0 0.0
    %476 = vmatpush1.msra.mxu0 0.0
    %477 = vmatprep.subr.mxu0 0.0
    %478 = vmatpush1.msra.mxu0 0.0
    %479 = vmatprep.subr.mxu0 0.0
    %480 = vmatpush1.msra.mxu0 0.0
    %481 = vmatprep.subr.mxu0 0.0
    %482 = vmatpush1.msra.mxu0 0.0
    %483 = vmatprep.subr.mxu0 0.0
    %484 = vmatpush1.msra.mxu0 0.0
    %485 = vmatprep.subr.mxu0 0.0
    %486 = vmatpush1.msra.mxu0 0.0
    %487 = vmatprep.subr.mxu0 0.0
    %488 = vmatpush1.msra.mxu0 0.0
    %489 = vmatprep.subr.mxu0 0.0
    %490 = vmatpush1.msra.mxu0 0.0
    %491 = vmatprep.subr.mxu0 0.0
    %492 = vmatpush1.msra.mxu0 0.0
    %493 = vmatprep.subr.mxu0 0.0
    %494 = vmatpush1.msra.mxu0 0.0
    %495 = vmatprep.mubr.f32.mxu0 0.0
    %v496 = vand.u32 %v140, 4294901760
    %v497 = vsub.f32 %v140, %v496
    %498 = vmatmul.mubr.f32.gmra.mrb[0].mxu0 %v497
    %v499 = vpop.f32.mrb[0].mxu0
    %v500 = vadd.f32 %v396, %v499
    %v501 = vpop.f32.mrb[0].mxu0
    %502 = vdwg.mxu0
    %503 = vmatprep.subr.mxu0 0.0
    %v504 = vand.u32 %v141, 4294901760
    %505 = vmatpush1.msra.mxu0 %v504
    %506 = vmatprep.subr.mxu0 0.0
    %v507 = vand.u32 %v142, 4294901760
    %508 = vmatpush1.msra.mxu0 %v507
    %509 = vmatprep.subr.mxu0 0.0
    %v510 = vand.u32 %v143, 4294901760
    %511 = vmatpush1.msra.mxu0 %v510
    %512 = vmatprep.subr.mxu0 0.0
    %v513 = vand.u32 %v144, 4294901760
    %514 = vmatpush1.msra.mxu0 %v513
    %515 = vmatprep.subr.mxu0 0.0
    %v516 = vand.u32 %v145, 4294901760
    %517 = vmatpush1.msra.mxu0 %v516
    %518 = vmatprep.subr.mxu0 0.0
    %v519 = vand.u32 %v146, 4294901760
    %520 = vmatpush1.msra.mxu0 %v519
    %521 = vmatprep.subr.mxu0 0.0
    %v522 = vand.u32 %v147, 4294901760
    %523 = vmatpush1.msra.mxu0 %v522
    %524 = vmatprep.subr.mxu0 0.0
    %v525 = vand.u32 %v148, 4294901760
    %526 = vmatpush1.msra.mxu0 %v525
    %527 = vmatprep.subr.mxu0 0.0
    %v528 = vand.u32 %v149, 4294901760
    %529 = vmatpush1.msra.mxu0 %v528
    %530 = vmatprep.subr.mxu0 0.0
    %v531 = vand.u32 %v150, 4294901760
    %532 = vmatpush1.msra.mxu0 %v531
    %533 = vmatprep.subr.mxu0 0.0
    %v534 = vand.u32 %v151, 4294901760
    %535 = vmatpush1.msra.mxu0 %v534
    %536 = vmatprep.subr.mxu0 0.0
    %v537 = vand.u32 %v152, 4294901760
    %538 = vmatpush1.msra.mxu0 %v537
    %539 = vmatprep.subr.mxu0 0.0
    %v540 = vand.u32 %v153, 4294901760
    %541 = vmatpush1.msra.mxu0 %v540
    %542 = vmatprep.subr.mxu0 0.0
    %v543 = vand.u32 %v154, 4294901760
    %544 = vmatpush1.msra.mxu0 %v543
    %545 = vmatprep.subr.mxu0 0.0
    %v546 = vand.u32 %v155, 4294901760
    %547 = vmatpush1.msra.mxu0 %v546
    %548 = vmatprep.subr.mxu0 0.0
    %v549 = vand.u32 %v156, 4294901760
    %550 = vmatpush1.msra.mxu0 %v549
    %551 = vmatprep.subr.mxu0 0.0
    %552 = vmatpush1.msra.mxu0 0.0
    %553 = vmatprep.subr.mxu0 0.0
    %554 = vmatpush1.msra.mxu0 0.0
    %555 = vmatprep.subr.mxu0 0.0
    %556 = vmatpush1.msra.mxu0 0.0
    %557 = vmatprep.subr.mxu0 0.0
    %558 = vmatpush1.msra.mxu0 0.0
    %559 = vmatprep.subr.mxu0 0.0
    %560 = vmatpush1.msra.mxu0 0.0
    %561 = vmatprep.subr.mxu0 0.0
    %562 = vmatpush1.msra.mxu0 0.0
    %563 = vmatprep.subr.mxu0 0.0
    %564 = vmatpush1.msra.mxu0 0.0
    %565 = vmatprep.subr.mxu0 0.0
    %566 = vmatpush1.msra.mxu0 0.0
    %567 = vmatprep.subr.mxu0 0.0
    %568 = vmatpush1.msra.mxu0 0.0
    %569 = vmatprep.subr.mxu0 0.0
    %570 = vmatpush1.msra.mxu0 0.0
    %571 = vmatprep.subr.mxu0 0.0
    %572 = vmatpush1.msra.mxu0 0.0
    %573 = vmatprep.subr.mxu0 0.0
    %574 = vmatpush1.msra.mxu0 0.0
    %575 = vmatprep.subr.mxu0 0.0
    %576 = vmatpush1.msra.mxu0 0.0
    %577 = vmatprep.subr.mxu0 0.0
    %578 = vmatpush1.msra.mxu0 0.0
    %579 = vmatprep.subr.mxu0 0.0
    %580 = vmatpush1.msra.mxu0 0.0
    %581 = vmatprep.subr.mxu0 0.0
    %582 = vmatpush1.msra.mxu0 0.0
    %583 = vmatprep.mubr.f32.mxu0 0.0
    %v584 = vand.u32 %v140, 4294901760
    %v585 = vsub.f32 %v140, %v584
    %v586 = vand.u32 %v585, 4294901760
    %587 = vmatmul.mubr.f32.gmra.mrb[0].mxu0 %v586
    %v588 = vpop.f32.mrb[0].mxu0
    %v589 = vadd.f32 %v500, %v588
    %v590 = vpop.f32.mrb[0].mxu0
    %591 = vdwg.mxu0
    %592 = vmatprep.subr.mxu0 0.0
    %v593 = vand.u32 %v141, 4294901760
    %v594 = vsub.f32 %v141, %v593
    %v595 = vand.u32 %v594, 4294901760
    %596 = vmatpush1.msra.mxu0 %v595
    %597 = vmatprep.subr.mxu0 0.0
    %v598 = vand.u32 %v142, 4294901760
    %v599 = vsub.f32 %v142, %v598
    %v600 = vand.u32 %v599, 4294901760
    %601 = vmatpush1.msra.mxu0 %v600
    %602 = vmatprep.subr.mxu0 0.0
    %v603 = vand.u32 %v143, 4294901760
    %v604 = vsub.f32 %v143, %v603
    %v605 = vand.u32 %v604, 4294901760
    %606 = vmatpush1.msra.mxu0 %v605
    %607 = vmatprep.subr.mxu0 0.0
    %v608 = vand.u32 %v144, 4294901760
    %v609 = vsub.f32 %v144, %v608
    %v610 = vand.u32 %v609, 4294901760
    %611 = vmatpush1.msra.mxu0 %v610
    %612 = vmatprep.subr.mxu0 0.0
    %v613 = vand.u32 %v145, 4294901760
    %v614 = vsub.f32 %v145, %v613
    %v615 = vand.u32 %v614, 4294901760
    %616 = vmatpush1.msra.mxu0 %v615
    %617 = vmatprep.subr.mxu0 0.0
    %v618 = vand.u32 %v146, 4294901760
    %v619 = vsub.f32 %v146, %v618
    %v620 = vand.u32 %v619, 4294901760
    %621 = vmatpush1.msra.mxu0 %v620
    %622 = vmatprep.subr.mxu0 0.0
    %v623 = vand.u32 %v147, 4294901760
    %v624 = vsub.f32 %v147, %v623
    %v625 = vand.u32 %v624, 4294901760
    %626 = vmatpush1.msra.mxu0 %v625
    %627 = vmatprep.subr.mxu0 0.0
    %v628 = vand.u32 %v148, 4294901760
    %v629 = vsub.f32 %v148, %v628
    %v630 = vand.u32 %v629, 4294901760
    %631 = vmatpush1.msra.mxu0 %v630
    %632 = vmatprep.subr.mxu0 0.0
    %v633 = vand.u32 %v149, 4294901760
    %v634 = vsub.f32 %v149, %v633
    %v635 = vand.u32 %v634, 4294901760
    %636 = vmatpush1.msra.mxu0 %v635
    %637 = vmatprep.subr.mxu0 0.0
    %v638 = vand.u32 %v150, 4294901760
    %v639 = vsub.f32 %v150, %v638
    %v640 = vand.u32 %v639, 4294901760
    %641 = vmatpush1.msra.mxu0 %v640
    %642 = vmatprep.subr.mxu0 0.0
    %v643 = vand.u32 %v151, 4294901760
    %v644 = vsub.f32 %v151, %v643
    %v645 = vand.u32 %v644, 4294901760
    %646 = vmatpush1.msra.mxu0 %v645
    %647 = vmatprep.subr.mxu0 0.0
    %v648 = vand.u32 %v152, 4294901760
    %v649 = vsub.f32 %v152, %v648
    %v650 = vand.u32 %v649, 4294901760
    %651 = vmatpush1.msra.mxu0 %v650
    %652 = vmatprep.subr.mxu0 0.0
    %v653 = vand.u32 %v153, 4294901760
    %v654 = vsub.f32 %v153, %v653
    %v655 = vand.u32 %v654, 4294901760
    %656 = vmatpush1.msra.mxu0 %v655
    %657 = vmatprep.subr.mxu0 0.0
    %v658 = vand.u32 %v154, 4294901760
    %v659 = vsub.f32 %v154, %v658
    %v660 = vand.u32 %v659, 4294901760
    %661 = vmatpush1.msra.mxu0 %v660
    %662 = vmatprep.subr.mxu0 0.0
    %v663 = vand.u32 %v155, 4294901760
    %v664 = vsub.f32 %v155, %v663
    %v665 = vand.u32 %v664, 4294901760
    %666 = vmatpush1.msra.mxu0 %v665
    %667 = vmatprep.subr.mxu0 0.0
    %v668 = vand.u32 %v156, 4294901760
    %v669 = vsub.f32 %v156, %v668
    %v670 = vand.u32 %v669, 4294901760
    %671 = vmatpush1.msra.mxu0 %v670
    %672 = vmatprep.subr.mxu0 0.0
    %673 = vmatpush1.msra.mxu0 0.0
    %674 = vmatprep.subr.mxu0 0.0
    %675 = vmatpush1.msra.mxu0 0.0
    %676 = vmatprep.subr.mxu0 0.0
    %677 = vmatpush1.msra.mxu0 0.0
    %678 = vmatprep.subr.mxu0 0.0
    %679 = vmatpush1.msra.mxu0 0.0
    %680 = vmatprep.subr.mxu0 0.0
    %681 = vmatpush1.msra.mxu0 0.0
    %682 = vmatprep.subr.mxu0 0.0
    %683 = vmatpush1.msra.mxu0 0.0
    %684 = vmatprep.subr.mxu0 0.0
    %685 = vmatpush1.msra.mxu0 0.0
    %686 = vmatprep.subr.mxu0 0.0
    %687 = vmatpush1.msra.mxu0 0.0
    %688 = vmatprep.subr.mxu0 0.0
    %689 = vmatpush1.msra.mxu0 0.0
    %690 = vmatprep.subr.mxu0 0.0
    %691 = vmatpush1.msra.mxu0 0.0
    %692 = vmatprep.subr.mxu0 0.0
    %693 = vmatpush1.msra.mxu0 0.0
    %694 = vmatprep.subr.mxu0 0.0
    %695 = vmatpush1.msra.mxu0 0.0
    %696 = vmatprep.subr.mxu0 0.0
    %697 = vmatpush1.msra.mxu0 0.0
    %698 = vmatprep.subr.mxu0 0.0
    %699 = vmatpush1.msra.mxu0 0.0
    %700 = vmatprep.subr.mxu0 0.0
    %701 = vmatpush1.msra.mxu0 0.0
    %702 = vmatprep.subr.mxu0 0.0
    %703 = vmatpush1.msra.mxu0 0.0
    %704 = vmatprep.mubr.f32.mxu0 0.0
    %v705 = vand.u32 %v140, 4294901760
    %706 = vmatmul.mubr.f32.gmra.mrb[0].mxu0 %v705
    %v707 = vpop.f32.mrb[0].mxu0
    %v708 = vadd.f32 %v589, %v707
    %v709 = vpop.f32.mrb[0].mxu0
    %710 = vdwg.mxu0
    %711 = vmatprep.subr.mxu0 0.0
    %v712 = vand.u32 %v141, 4294901760
    %713 = vmatpush1.msra.mxu0 %v712
    %714 = vmatprep.subr.mxu0 0.0
    %v715 = vand.u32 %v142, 4294901760
    %716 = vmatpush1.msra.mxu0 %v715
    %717 = vmatprep.subr.mxu0 0.0
    %v718 = vand.u32 %v143, 4294901760
    %719 = vmatpush1.msra.mxu0 %v718
    %720 = vmatprep.subr.mxu0 0.0
    %v721 = vand.u32 %v144, 4294901760
    %722 = vmatpush1.msra.mxu0 %v721
    %723 = vmatprep.subr.mxu0 0.0
    %v724 = vand.u32 %v145, 4294901760
    %725 = vmatpush1.msra.mxu0 %v724
    %726 = vmatprep.subr.mxu0 0.0
    %v727 = vand.u32 %v146, 4294901760
    %728 = vmatpush1.msra.mxu0 %v727
    %729 = vmatprep.subr.mxu0 0.0
    %v730 = vand.u32 %v147, 4294901760
    %731 = vmatpush1.msra.mxu0 %v730
    %732 = vmatprep.subr.mxu0 0.0
    %v733 = vand.u32 %v148, 4294901760
    %734 = vmatpush1.msra.mxu0 %v733
    %735 = vmatprep.subr.mxu0 0.0
    %v736 = vand.u32 %v149, 4294901760
    %737 = vmatpush1.msra.mxu0 %v736
    %738 = vmatprep.subr.mxu0 0.0
    %v739 = vand.u32 %v150, 4294901760
    %740 = vmatpush1.msra.mxu0 %v739
    %741 = vmatprep.subr.mxu0 0.0
    %v742 = vand.u32 %v151, 4294901760
    %743 = vmatpush1.msra.mxu0 %v742
    %744 = vmatprep.subr.mxu0 0.0
    %v745 = vand.u32 %v152, 4294901760
    %746 = vmatpush1.msra.mxu0 %v745
    %747 = vmatprep.subr.mxu0 0.0
    %v748 = vand.u32 %v153, 4294901760
    %749 = vmatpush1.msra.mxu0 %v748
    %750 = vmatprep.subr.mxu0 0.0
    %v751 = vand.u32 %v154, 4294901760
    %752 = vmatpush1.msra.mxu0 %v751
    %753 = vmatprep.subr.mxu0 0.0
    %v754 = vand.u32 %v155, 4294901760
    %755 = vmatpush1.msra.mxu0 %v754
    %756 = vmatprep.subr.mxu0 0.0
    %v757 = vand.u32 %v156, 4294901760
    %758 = vmatpush1.msra.mxu0 %v757
    %759 = vmatprep.subr.mxu0 0.0
    %760 = vmatpush1.msra.mxu0 0.0
    %761 = vmatprep.subr.mxu0 0.0
    %762 = vmatpush1.msra.mxu0 0.0
    %763 = vmatprep.subr.mxu0 0.0
    %764 = vmatpush1.msra.mxu0 0.0
    %765 = vmatprep.subr.mxu0 0.0
    %766 = vmatpush1.msra.mxu0 0.0
    %767 = vmatprep.subr.mxu0 0.0
    %768 = vmatpush1.msra.mxu0 0.0
    %769 = vmatprep.subr.mxu0 0.0
    %770 = vmatpush1.msra.mxu0 0.0
    %771 = vmatprep.subr.mxu0 0.0
    %772 = vmatpush1.msra.mxu0 0.0
    %773 = vmatprep.subr.mxu0 0.0
    %774 = vmatpush1.msra.mxu0 0.0
    %775 = vmatprep.subr.mxu0 0.0
    %776 = vmatpush1.msra.mxu0 0.0
    %777 = vmatprep.subr.mxu0 0.0
    %778 = vmatpush1.msra.mxu0 0.0
    %779 = vmatprep.subr.mxu0 0.0
    %780 = vmatpush1.msra.mxu0 0.0
    %781 = vmatprep.subr.mxu0 0.0
    %782 = vmatpush1.msra.mxu0 0.0
    %783 = vmatprep.subr.mxu0 0.0
    %784 = vmatpush1.msra.mxu0 0.0
    %785 = vmatprep.subr.mxu0 0.0
    %786 = vmatpush1.msra.mxu0 0.0
    %787 = vmatprep.subr.mxu0 0.0
    %788 = vmatpush1.msra.mxu0 0.0
    %789 = vmatprep.subr.mxu0 0.0
    %790 = vmatpush1.msra.mxu0 0.0
    %791 = vmatprep.mubr.f32.mxu0 0.0
    %v792 = vand.u32 %v140, 4294901760
    %793 = vmatmul.mubr.f32.gmra.mrb[0].mxu0 %v792
    %v794 = vpop.f32.mrb[0].mxu0
    %v795 = vadd.f32 %v708, %v794
    %v796 = vpop.f32.mrb[0].mxu0
    %797 = vdwg.mxu0
    %v798 = vld [vmem:[#allocation4] sm:$0xff]
    %v799 = vld [vmem:[#allocation4 + $0x8] sm:$0xff]
    %v800 = vld [vmem:[#allocation4 + $0x10] sm:$0xff]
    %v801 = vld [vmem:[#allocation4 + $0x18] sm:$0xff]
    %v802 = vld [vmem:[#allocation4 + $0x20] sm:$0xff]
    %v803 = vld [vmem:[#allocation4 + $0x28] sm:$0xff]
    %v804 = vld [vmem:[#allocation4 + $0x30] sm:$0xff]
    %v805 = vld [vmem:[#allocation4 + $0x38] sm:$0xff]
    %v806 = vld [vmem:[#allocation4 + $0x40] sm:$0xff]
    %v807 = vld [vmem:[#allocation4 + $0x48] sm:$0xff]
    %v808 = vld [vmem:[#allocation4 + $0x50] sm:$0xff]
    %v809 = vld [vmem:[#allocation4 + $0x58] sm:$0xff]
    %v810 = vld [vmem:[#allocation4 + $0x60] sm:$0xff]
    %v811 = vld [vmem:[#allocation4 + $0x68] sm:$0xff]
    %v812 = vld [vmem:[#allocation4 + $0x70] sm:$0xff]
    %v813 = vld [vmem:[#allocation4 + $0x78] sm:$0xff]
    %814 = vmatprep.subr.mxu0 0.0
    %v815 = vand.u32 %v798, 4294901760
    %816 = vmatpush1.msra.mxu0 %v815
    %817 = vmatprep.subr.mxu0 0.0
    %v818 = vand.u32 %v799, 4294901760
    %819 = vmatpush1.msra.mxu0 %v818
    %820 = vmatprep.subr.mxu0 0.0
    %v821 = vand.u32 %v800, 4294901760
    %822 = vmatpush1.msra.mxu0 %v821
    %823 = vmatprep.subr.mxu0 0.0
    %v824 = vand.u32 %v801, 4294901760
    %825 = vmatpush1.msra.mxu0 %v824
    %826 = vmatprep.subr.mxu0 0.0
    %v827 = vand.u32 %v802, 4294901760
    %828 = vmatpush1.msra.mxu0 %v827
    %829 = vmatprep.subr.mxu0 0.0
    %v830 = vand.u32 %v803, 4294901760
    %831 = vmatpush1.msra.mxu0 %v830
    %832 = vmatprep.subr.mxu0 0.0
    %v833 = vand.u32 %v804, 4294901760
    %834 = vmatpush1.msra.mxu0 %v833
    %835 = vmatprep.subr.mxu0 0.0
    %v836 = vand.u32 %v805, 4294901760
    %837 = vmatpush1.msra.mxu0 %v836
    %838 = vmatprep.subr.mxu0 0.0
    %v839 = vand.u32 %v806, 4294901760
    %840 = vmatpush1.msra.mxu0 %v839
    %841 = vmatprep.subr.mxu0 0.0
    %v842 = vand.u32 %v807, 4294901760
    %843 = vmatpush1.msra.mxu0 %v842
    %844 = vmatprep.subr.mxu0 0.0
    %v845 = vand.u32 %v808, 4294901760
    %846 = vmatpush1.msra.mxu0 %v845
    %847 = vmatprep.subr.mxu0 0.0
    %v848 = vand.u32 %v809, 4294901760
    %849 = vmatpush1.msra.mxu0 %v848
    %850 = vmatprep.subr.mxu0 0.0
    %v851 = vand.u32 %v810, 4294901760
    %852 = vmatpush1.msra.mxu0 %v851
    %853 = vmatprep.subr.mxu0 0.0
    %v854 = vand.u32 %v811, 4294901760
    %855 = vmatpush1.msra.mxu0 %v854
    %856 = vmatprep.subr.mxu0 0.0
    %v857 = vand.u32 %v812, 4294901760
    %858 = vmatpush1.msra.mxu0 %v857
    %859 = vmatprep.subr.mxu0 0.0
    %v860 = vand.u32 %v813, 4294901760
    %861 = vmatpush1.msra.mxu0 %v860
    %862 = vmatprep.subr.mxu0 0.0
    %863 = vmatpush1.msra.mxu0 0.0
    %864 = vmatprep.subr.mxu0 0.0
    %865 = vmatpush1.msra.mxu0 0.0
    %866 = vmatprep.subr.mxu0 0.0
    %867 = vmatpush1.msra.mxu0 0.0
    %868 = vmatprep.subr.mxu0 0.0
    %869 = vmatpush1.msra.mxu0 0.0
    %870 = vmatprep.subr.mxu0 0.0
    %871 = vmatpush1.msra.mxu0 0.0
    %872 = vmatprep.subr.mxu0 0.0
    %873 = vmatpush1.msra.mxu0 0.0
    %874 = vmatprep.subr.mxu0 0.0
    %875 = vmatpush1.msra.mxu0 0.0
    %876 = vmatprep.subr.mxu0 0.0
    %877 = vmatpush1.msra.mxu0 0.0
    %878 = vmatprep.subr.mxu0 0.0
    %879 = vmatpush1.msra.mxu0 0.0
    %880 = vmatprep.subr.mxu0 0.0
    %881 = vmatpush1.msra.mxu0 0.0
    %882 = vmatprep.subr.mxu0 0.0
    %883 = vmatpush1.msra.mxu0 0.0
    %884 = vmatprep.subr.mxu0 0.0
    %885 = vmatpush1.msra.mxu0 0.0
    %886 = vmatprep.subr.mxu0 0.0
    %887 = vmatpush1.msra.mxu0 0.0
    %888 = vmatprep.subr.mxu0 0.0
    %889 = vmatpush1.msra.mxu0 0.0
    %890 = vmatprep.subr.mxu0 0.0
    %891 = vmatpush1.msra.mxu0 0.0
    %892 = vmatprep.subr.mxu0 0.0
    %893 = vmatpush1.msra.mxu0 0.0
    %894 = vmatprep.mubr.f32.mxu0 0.0
    %v895 = vand.u32 %v795, 4294901760
    %v896 = vsub.f32 %v795, %v895
    %v897 = vand.u32 %v896, 4294901760
    %v898 = vsub.f32 %v896, %v897
    %v899 = vand.u32 %v898, 4294901760
    %900 = vmatmul.mubr.f32.gmra.mrb[0].mxu0 %v899
    %v901 = vpop.f32.mrb[0].mxu0
    %v902 = vadd.f32 0.0, %v901
    %v903 = vpop.f32.mrb[0].mxu0
    %904 = vdwg.mxu0
    %905 = vmatprep.subr.mxu0 0.0
    %v906 = vand.u32 %v798, 4294901760
    %v907 = vsub.f32 %v798, %v906
    %v908 = vand.u32 %v907, 4294901760
    %v909 = vsub.f32 %v907, %v908
    %v910 = vand.u32 %v909, 4294901760
    %911 = vmatpush1.msra.mxu0 %v910
    %912 = vmatprep.subr.mxu0 0.0
    %v913 = vand.u32 %v799, 4294901760
    %v914 = vsub.f32 %v799, %v913
    %v915 = vand.u32 %v914, 4294901760
    %v916 = vsub.f32 %v914, %v915
    %v917 = vand.u32 %v916, 4294901760
    %918 = vmatpush1.msra.mxu0 %v917
    %919 = vmatprep.subr.mxu0 0.0
    %v920 = vand.u32 %v800, 4294901760
    %v921 = vsub.f32 %v800, %v920
    %v922 = vand.u32 %v921, 4294901760
    %v923 = vsub.f32 %v921, %v922
    %v924 = vand.u32 %v923, 4294901760
    %925 = vmatpush1.msra.mxu0 %v924
    %926 = vmatprep.subr.mxu0 0.0
    %v927 = vand.u32 %v801, 4294901760
    %v928 = vsub.f32 %v801, %v927
    %v929 = vand.u32 %v928, 4294901760
    %v930 = vsub.f32 %v928, %v929
    %v931 = vand.u32 %v930, 4294901760
    %932 = vmatpush1.msra.mxu0 %v931
    %933 = vmatprep.subr.mxu0 0.0
    %v934 = vand.u32 %v802, 4294901760
    %v935 = vsub.f32 %v802, %v934
    %v936 = vand.u32 %v935, 4294901760
    %v937 = vsub.f32 %v935, %v936
    %v938 = vand.u32 %v937, 4294901760
    %939 = vmatpush1.msra.mxu0 %v938
    %940 = vmatprep.subr.mxu0 0.0
    %v941 = vand.u32 %v803, 4294901760
    %v942 = vsub.f32 %v803, %v941
    %v943 = vand.u32 %v942, 4294901760
    %v944 = vsub.f32 %v942, %v943
    %v945 = vand.u32 %v944, 4294901760
    %946 = vmatpush1.msra.mxu0 %v945
    %947 = vmatprep.subr.mxu0 0.0
    %v948 = vand.u32 %v804, 4294901760
    %v949 = vsub.f32 %v804, %v948
    %v950 = vand.u32 %v949, 4294901760
    %v951 = vsub.f32 %v949, %v950
    %v952 = vand.u32 %v951, 4294901760
    %953 = vmatpush1.msra.mxu0 %v952
    %954 = vmatprep.subr.mxu0 0.0
    %v955 = vand.u32 %v805, 4294901760
    %v956 = vsub.f32 %v805, %v955
    %v957 = vand.u32 %v956, 4294901760
    %v958 = vsub.f32 %v956, %v957
    %v959 = vand.u32 %v958, 4294901760
    %960 = vmatpush1.msra.mxu0 %v959
    %961 = vmatprep.subr.mxu0 0.0
    %v962 = vand.u32 %v806, 4294901760
    %v963 = vsub.f32 %v806, %v962
    %v964 = vand.u32 %v963, 4294901760
    %v965 = vsub.f32 %v963, %v964
    %v966 = vand.u32 %v965, 4294901760
    %967 = vmatpush1.msra.mxu0 %v966
    %968 = vmatprep.subr.mxu0 0.0
    %v969 = vand.u32 %v807, 4294901760
    %v970 = vsub.f32 %v807, %v969
    %v971 = vand.u32 %v970, 4294901760
    %v972 = vsub.f32 %v970, %v971
    %v973 = vand.u32 %v972, 4294901760
    %974 = vmatpush1.msra.mxu0 %v973
    %975 = vmatprep.subr.mxu0 0.0
    %v976 = vand.u32 %v808, 4294901760
    %v977 = vsub.f32 %v808, %v976
    %v978 = vand.u32 %v977, 4294901760
    %v979 = vsub.f32 %v977, %v978
    %v980 = vand.u32 %v979, 4294901760
    %981 = vmatpush1.msra.mxu0 %v980
    %982 = vmatprep.subr.mxu0 0.0
    %v983 = vand.u32 %v809, 4294901760
    %v984 = vsub.f32 %v809, %v983
    %v985 = vand.u32 %v984, 4294901760
    %v986 = vsub.f32 %v984, %v985
    %v987 = vand.u32 %v986, 4294901760
    %988 = vmatpush1.msra.mxu0 %v987
    %989 = vmatprep.subr.mxu0 0.0
    %v990 = vand.u32 %v810, 4294901760
    %v991 = vsub.f32 %v810, %v990
    %v992 = vand.u32 %v991, 4294901760
    %v993 = vsub.f32 %v991, %v992
    %v994 = vand.u32 %v993, 4294901760
    %995 = vmatpush1.msra.mxu0 %v994
    %996 = vmatprep.subr.mxu0 0.0
    %v997 = vand.u32 %v811, 4294901760
    %v998 = vsub.f32 %v811, %v997
    %v999 = vand.u32 %v998, 4294901760
    %v1000 = vsub.f32 %v998, %v999
    %v1001 = vand.u32 %v1000, 4294901760
    %1002 = vmatpush1.msra.mxu0 %v1001
    %1003 = vmatprep.subr.mxu0 0.0
    %v1004 = vand.u32 %v812, 4294901760
    %v1005 = vsub.f32 %v812, %v1004
    %v1006 = vand.u32 %v1005, 4294901760
    %v1007 = vsub.f32 %v1005, %v1006
    %v1008 = vand.u32 %v1007, 4294901760
    %1009 = vmatpush1.msra.mxu0 %v1008
    %1010 = vmatprep.subr.mxu0 0.0
    %v1011 = vand.u32 %v813, 4294901760
    %v1012 = vsub.f32 %v813, %v1011
    %v1013 = vand.u32 %v1012, 4294901760
    %v1014 = vsub.f32 %v1012, %v1013
    %v1015 = vand.u32 %v1014, 4294901760
    %1016 = vmatpush1.msra.mxu0 %v1015
    %1017 = vmatprep.subr.mxu0 0.0
    %1018 = vmatpush1.msra.mxu0 0.0
    %1019 = vmatprep.subr.mxu0 0.0
    %1020 = vmatpush1.msra.mxu0 0.0
    %1021 = vmatprep.subr.mxu0 0.0
    %1022 = vmatpush1.msra.mxu0 0.0
    %1023 = vmatprep.subr.mxu0 0.0
    %1024 = vmatpush1.msra.mxu0 0.0
    %1025 = vmatprep.subr.mxu0 0.0
    %1026 = vmatpush1.msra.mxu0 0.0
    %1027 = vmatprep.subr.mxu0 0.0
    %1028 = vmatpush1.msra.mxu0 0.0
    %1029 = vmatprep.subr.mxu0 0.0
    %1030 = vmatpush1.msra.mxu0 0.0
    %1031 = vmatprep.subr.mxu0 0.0
    %1032 = vmatpush1.msra.mxu0 0.0
    %1033 = vmatprep.subr.mxu0 0.0
    %1034 = vmatpush1.msra.mxu0 0.0
    %1035 = vmatprep.subr.mxu0 0.0
    %1036 = vmatpush1.msra.mxu0 0.0
    %1037 = vmatprep.subr.mxu0 0.0
    %1038 = vmatpush1.msra.mxu0 0.0
    %1039 = vmatprep.subr.mxu0 0.0
    %1040 = vmatpush1.msra.mxu0 0.0
    %1041 = vmatprep.subr.mxu0 0.0
    %1042 = vmatpush1.msra.mxu0 0.0
    %1043 = vmatprep.subr.mxu0 0.0
    %1044 = vmatpush1.msra.mxu0 0.0
    %1045 = vmatprep.subr.mxu0 0.0
    %1046 = vmatpush1.msra.mxu0 0.0
    %1047 = vmatprep.subr.mxu0 0.0
    %1048 = vmatpush1.msra.mxu0 0.0
    %1049 = vmatprep.mubr.f32.mxu0 0.0
    %v1050 = vand.u32 %v795, 4294901760
    %1051 = vmatmul.mubr.f32.gmra.mrb[0].mxu0 %v1050
    %v1052 = vpop.f32.mrb[0].mxu0
    %v1053 = vadd.f32 %v902, %v1052
    %v1054 = vpop.f32.mrb[0].mxu0
    %1055 = vdwg.mxu0
    %1056 = vmatprep.subr.mxu0 0.0
    %v1057 = vand.u32 %v798, 4294901760
    %v1058 = vsub.f32 %v798, %v1057
    %1059 = vmatpush1.msra.mxu0 %v1058
    %1060 = vmatprep.subr.mxu0 0.0
    %v1061 = vand.u32 %v799, 4294901760
    %v1062 = vsub.f32 %v799, %v1061
    %1063 = vmatpush1.msra.mxu0 %v1062
    %1064 = vmatprep.subr.mxu0 0.0
    %v1065 = vand.u32 %v800, 4294901760
    %v1066 = vsub.f32 %v800, %v1065
    %1067 = vmatpush1.msra.mxu0 %v1066
    %1068 = vmatprep.subr.mxu0 0.0
    %v1069 = vand.u32 %v801, 4294901760
    %v1070 = vsub.f32 %v801, %v1069
    %1071 = vmatpush1.msra.mxu0 %v1070
    %1072 = vmatprep.subr.mxu0 0.0
    %v1073 = vand.u32 %v802, 4294901760
    %v1074 = vsub.f32 %v802, %v1073
    %1075 = vmatpush1.msra.mxu0 %v1074
    %1076 = vmatprep.subr.mxu0 0.0
    %v1077 = vand.u32 %v803, 4294901760
    %v1078 = vsub.f32 %v803, %v1077
    %1079 = vmatpush1.msra.mxu0 %v1078
    %1080 = vmatprep.subr.mxu0 0.0
    %v1081 = vand.u32 %v804, 4294901760
    %v1082 = vsub.f32 %v804, %v1081
    %1083 = vmatpush1.msra.mxu0 %v1082
    %1084 = vmatprep.subr.mxu0 0.0
    %v1085 = vand.u32 %v805, 4294901760
    %v1086 = vsub.f32 %v805, %v1085
    %1087 = vmatpush1.msra.mxu0 %v1086
    %1088 = vmatprep.subr.mxu0 0.0
    %v1089 = vand.u32 %v806, 4294901760
    %v1090 = vsub.f32 %v806, %v1089
    %1091 = vmatpush1.msra.mxu0 %v1090
    %1092 = vmatprep.subr.mxu0 0.0
    %v1093 = vand.u32 %v807, 4294901760
    %v1094 = vsub.f32 %v807, %v1093
    %1095 = vmatpush1.msra.mxu0 %v1094
    %1096 = vmatprep.subr.mxu0 0.0
    %v1097 = vand.u32 %v808, 4294901760
    %v1098 = vsub.f32 %v808, %v1097
    %1099 = vmatpush1.msra.mxu0 %v1098
    %1100 = vmatprep.subr.mxu0 0.0
    %v1101 = vand.u32 %v809, 4294901760
    %v1102 = vsub.f32 %v809, %v1101
    %1103 = vmatpush1.msra.mxu0 %v1102
    %1104 = vmatprep.subr.mxu0 0.0
    %v1105 = vand.u32 %v810, 4294901760
    %v1106 = vsub.f32 %v810, %v1105
    %1107 = vmatpush1.msra.mxu0 %v1106
    %1108 = vmatprep.subr.mxu0 0.0
    %v1109 = vand.u32 %v811, 4294901760
    %v1110 = vsub.f32 %v811, %v1109
    %1111 = vmatpush1.msra.mxu0 %v1110
    %1112 = vmatprep.subr.mxu0 0.0
    %v1113 = vand.u32 %v812, 4294901760
    %v1114 = vsub.f32 %v812, %v1113
    %1115 = vmatpush1.msra.mxu0 %v1114
    %1116 = vmatprep.subr.mxu0 0.0
    %v1117 = vand.u32 %v813, 4294901760
    %v1118 = vsub.f32 %v813, %v1117
    %1119 = vmatpush1.msra.mxu0 %v1118
    %1120 = vmatprep.subr.mxu0 0.0
    %1121 = vmatpush1.msra.mxu0 0.0
    %1122 = vmatprep.subr.mxu0 0.0
    %1123 = vmatpush1.msra.mxu0 0.0
    %1124 = vmatprep.subr.mxu0 0.0
    %1125 = vmatpush1.msra.mxu0 0.0
    %1126 = vmatprep.subr.mxu0 0.0
    %1127 = vmatpush1.msra.mxu0 0.0
    %1128 = vmatprep.subr.mxu0 0.0
    %1129 = vmatpush1.msra.mxu0 0.0
    %1130 = vmatprep.subr.mxu0 0.0
    %1131 = vmatpush1.msra.mxu0 0.0
    %1132 = vmatprep.subr.mxu0 0.0
    %1133 = vmatpush1.msra.mxu0 0.0
    %1134 = vmatprep.subr.mxu0 0.0
    %1135 = vmatpush1.msra.mxu0 0.0
    %1136 = vmatprep.subr.mxu0 0.0
    %1137 = vmatpush1.msra.mxu0 0.0
    %1138 = vmatprep.subr.mxu0 0.0
    %1139 = vmatpush1.msra.mxu0 0.0
    %1140 = vmatprep.subr.mxu0 0.0
    %1141 = vmatpush1.msra.mxu0 0.0
    %1142 = vmatprep.subr.mxu0 0.0
    %1143 = vmatpush1.msra.mxu0 0.0
    %1144 = vmatprep.subr.mxu0 0.0
    %1145 = vmatpush1.msra.mxu0 0.0
    %1146 = vmatprep.subr.mxu0 0.0
    %1147 = vmatpush1.msra.mxu0 0.0
    %1148 = vmatprep.subr.mxu0 0.0
    %1149 = vmatpush1.msra.mxu0 0.0
    %1150 = vmatprep.subr.mxu0 0.0
    %1151 = vmatpush1.msra.mxu0 0.0
    %1152 = vmatprep.mubr.f32.mxu0 0.0
    %v1153 = vand.u32 %v795, 4294901760
    %v1154 = vsub.f32 %v795, %v1153
    %1155 = vmatmul.mubr.f32.gmra.mrb[0].mxu0 %v1154
    %v1156 = vpop.f32.mrb[0].mxu0
    %v1157 = vadd.f32 %v1053, %v1156
    %v1158 = vpop.f32.mrb[0].mxu0
    %1159 = vdwg.mxu0
    %1160 = vmatprep.subr.mxu0 0.0
    %v1161 = vand.u32 %v798, 4294901760
    %1162 = vmatpush1.msra.mxu0 %v1161
    %1163 = vmatprep.subr.mxu0 0.0
    %v1164 = vand.u32 %v799, 4294901760
    %1165 = vmatpush1.msra.mxu0 %v1164
    %1166 = vmatprep.subr.mxu0 0.0
    %v1167 = vand.u32 %v800, 4294901760
    %1168 = vmatpush1.msra.mxu0 %v1167
    %1169 = vmatprep.subr.mxu0 0.0
    %v1170 = vand.u32 %v801, 4294901760
    %1171 = vmatpush1.msra.mxu0 %v1170
    %1172 = vmatprep.subr.mxu0 0.0
    %v1173 = vand.u32 %v802, 4294901760
    %1174 = vmatpush1.msra.mxu0 %v1173
    %1175 = vmatprep.subr.mxu0 0.0
    %v1176 = vand.u32 %v803, 4294901760
    %1177 = vmatpush1.msra.mxu0 %v1176
    %1178 = vmatprep.subr.mxu0 0.0
    %v1179 = vand.u32 %v804, 4294901760
    %1180 = vmatpush1.msra.mxu0 %v1179
    %1181 = vmatprep.subr.mxu0 0.0
    %v1182 = vand.u32 %v805, 4294901760
    %1183 = vmatpush1.msra.mxu0 %v1182
    %1184 = vmatprep.subr.mxu0 0.0
    %v1185 = vand.u32 %v806, 4294901760
    %1186 = vmatpush1.msra.mxu0 %v1185
    %1187 = vmatprep.subr.mxu0 0.0
    %v1188 = vand.u32 %v807, 4294901760
    %1189 = vmatpush1.msra.mxu0 %v1188
    %1190 = vmatprep.subr.mxu0 0.0
    %v1191 = vand.u32 %v808, 4294901760
    %1192 = vmatpush1.msra.mxu0 %v1191
    %1193 = vmatprep.subr.mxu0 0.0
    %v1194 = vand.u32 %v809, 4294901760
    %1195 = vmatpush1.msra.mxu0 %v1194
    %1196 = vmatprep.subr.mxu0 0.0
    %v1197 = vand.u32 %v810, 4294901760
    %1198 = vmatpush1.msra.mxu0 %v1197
    %1199 = vmatprep.subr.mxu0 0.0
    %v1200 = vand.u32 %v811, 4294901760
    %1201 = vmatpush1.msra.mxu0 %v1200
    %1202 = vmatprep.subr.mxu0 0.0
    %v1203 = vand.u32 %v812, 4294901760
    %1204 = vmatpush1.msra.mxu0 %v1203
    %1205 = vmatprep.subr.mxu0 0.0
    %v1206 = vand.u32 %v813, 4294901760
    %1207 = vmatpush1.msra.mxu0 %v1206
    %1208 = vmatprep.subr.mxu0 0.0
    %1209 = vmatpush1.msra.mxu0 0.0
    %1210 = vmatprep.subr.mxu0 0.0
    %1211 = vmatpush1.msra.mxu0 0.0
    %1212 = vmatprep.subr.mxu0 0.0
    %1213 = vmatpush1.msra.mxu0 0.0
    %1214 = vmatprep.subr.mxu0 0.0
    %1215 = vmatpush1.msra.mxu0 0.0
    %1216 = vmatprep.subr.mxu0 0.0
    %1217 = vmatpush1.msra.mxu0 0.0
    %1218 = vmatprep.subr.mxu0 0.0
    %1219 = vmatpush1.msra.mxu0 0.0
    %1220 = vmatprep.subr.mxu0 0.0
    %1221 = vmatpush1.msra.mxu0 0.0
    %1222 = vmatprep.subr.mxu0 0.0
    %1223 = vmatpush1.msra.mxu0 0.0
    %1224 = vmatprep.subr.mxu0 0.0
    %1225 = vmatpush1.msra.mxu0 0.0
    %1226 = vmatprep.subr.mxu0 0.0
    %1227 = vmatpush1.msra.mxu0 0.0
    %1228 = vmatprep.subr.mxu0 0.0
    %1229 = vmatpush1.msra.mxu0 0.0
    %1230 = vmatprep.subr.mxu0 0.0
    %1231 = vmatpush1.msra.mxu0 0.0
    %1232 = vmatprep.subr.mxu0 0.0
    %1233 = vmatpush1.msra.mxu0 0.0
    %1234 = vmatprep.subr.mxu0 0.0
    %1235 = vmatpush1.msra.mxu0 0.0
    %1236 = vmatprep.subr.mxu0 0.0
    %1237 = vmatpush1.msra.mxu0 0.0
    %1238 = vmatprep.subr.mxu0 0.0
    %1239 = vmatpush1.msra.mxu0 0.0
    %1240 = vmatprep.mubr.f32.mxu0 0.0
    %v1241 = vand.u32 %v795, 4294901760
    %v1242 = vsub.f32 %v795, %v1241
    %v1243 = vand.u32 %v1242, 4294901760
    %1244 = vmatmul.mubr.f32.gmra.mrb[0].mxu0 %v1243
    %v1245 = vpop.f32.mrb[0].mxu0
    %v1246 = vadd.f32 %v1157, %v1245
    %v1247 = vpop.f32.mrb[0].mxu0
    %1248 = vdwg.mxu0
    %1249 = vmatprep.subr.mxu0 0.0
    %v1250 = vand.u32 %v798, 4294901760
    %v1251 = vsub.f32 %v798, %v1250
    %v1252 = vand.u32 %v1251, 4294901760
    %1253 = vmatpush1.msra.mxu0 %v1252
    %1254 = vmatprep.subr.mxu0 0.0
    %v1255 = vand.u32 %v799, 4294901760
    %v1256 = vsub.f32 %v799, %v1255
    %v1257 = vand.u32 %v1256, 4294901760
    %1258 = vmatpush1.msra.mxu0 %v1257
    %1259 = vmatprep.subr.mxu0 0.0
    %v1260 = vand.u32 %v800, 4294901760
    %v1261 = vsub.f32 %v800, %v1260
    %v1262 = vand.u32 %v1261, 4294901760
    %1263 = vmatpush1.msra.mxu0 %v1262
    %1264 = vmatprep.subr.mxu0 0.0
    %v1265 = vand.u32 %v801, 4294901760
    %v1266 = vsub.f32 %v801, %v1265
    %v1267 = vand.u32 %v1266, 4294901760
    %1268 = vmatpush1.msra.mxu0 %v1267
    %1269 = vmatprep.subr.mxu0 0.0
    %v1270 = vand.u32 %v802, 4294901760
    %v1271 = vsub.f32 %v802, %v1270
    %v1272 = vand.u32 %v1271, 4294901760
    %1273 = vmatpush1.msra.mxu0 %v1272
    %1274 = vmatprep.subr.mxu0 0.0
    %v1275 = vand.u32 %v803, 4294901760
    %v1276 = vsub.f32 %v803, %v1275
    %v1277 = vand.u32 %v1276, 4294901760
    %1278 = vmatpush1.msra.mxu0 %v1277
    %1279 = vmatprep.subr.mxu0 0.0
    %v1280 = vand.u32 %v804, 4294901760
    %v1281 = vsub.f32 %v804, %v1280
    %v1282 = vand.u32 %v1281, 4294901760
    %1283 = vmatpush1.msra.mxu0 %v1282
    %1284 = vmatprep.subr.mxu0 0.0
    %v1285 = vand.u32 %v805, 4294901760
    %v1286 = vsub.f32 %v805, %v1285
    %v1287 = vand.u32 %v1286, 4294901760
    %1288 = vmatpush1.msra.mxu0 %v1287
    %1289 = vmatprep.subr.mxu0 0.0
    %v1290 = vand.u32 %v806, 4294901760
    %v1291 = vsub.f32 %v806, %v1290
    %v1292 = vand.u32 %v1291, 4294901760
    %1293 = vmatpush1.msra.mxu0 %v1292
    %1294 = vmatprep.subr.mxu0 0.0
    %v1295 = vand.u32 %v807, 4294901760
    %v1296 = vsub.f32 %v807, %v1295
    %v1297 = vand.u32 %v1296, 4294901760
    %1298 = vmatpush1.msra.mxu0 %v1297
    %1299 = vmatprep.subr.mxu0 0.0
    %v1300 = vand.u32 %v808, 4294901760
    %v1301 = vsub.f32 %v808, %v1300
    %v1302 = vand.u32 %v1301, 4294901760
    %1303 = vmatpush1.msra.mxu0 %v1302
    %1304 = vmatprep.subr.mxu0 0.0
    %v1305 = vand.u32 %v809, 4294901760
    %v1306 = vsub.f32 %v809, %v1305
    %v1307 = vand.u32 %v1306, 4294901760
    %1308 = vmatpush1.msra.mxu0 %v1307
    %1309 = vmatprep.subr.mxu0 0.0
    %v1310 = vand.u32 %v810, 4294901760
    %v1311 = vsub.f32 %v810, %v1310
    %v1312 = vand.u32 %v1311, 4294901760
    %1313 = vmatpush1.msra.mxu0 %v1312
    %1314 = vmatprep.subr.mxu0 0.0
    %v1315 = vand.u32 %v811, 4294901760
    %v1316 = vsub.f32 %v811, %v1315
    %v1317 = vand.u32 %v1316, 4294901760
    %1318 = vmatpush1.msra.mxu0 %v1317
    %1319 = vmatprep.subr.mxu0 0.0
    %v1320 = vand.u32 %v812, 4294901760
    %v1321 = vsub.f32 %v812, %v1320
    %v1322 = vand.u32 %v1321, 4294901760
    %1323 = vmatpush1.msra.mxu0 %v1322
    %1324 = vmatprep.subr.mxu0 0.0
    %v1325 = vand.u32 %v813, 4294901760
    %v1326 = vsub.f32 %v813, %v1325
    %v1327 = vand.u32 %v1326, 4294901760
    %1328 = vmatpush1.msra.mxu0 %v1327
    %1329 = vmatprep.subr.mxu0 0.0
    %1330 = vmatpush1.msra.mxu0 0.0
    %1331 = vmatprep.subr.mxu0 0.0
    %1332 = vmatpush1.msra.mxu0 0.0
    %1333 = vmatprep.subr.mxu0 0.0
    %1334 = vmatpush1.msra.mxu0 0.0
    %1335 = vmatprep.subr.mxu0 0.0
    %1336 = vmatpush1.msra.mxu0 0.0
    %1337 = vmatprep.subr.mxu0 0.0
    %1338 = vmatpush1.msra.mxu0 0.0
    %1339 = vmatprep.subr.mxu0 0.0
    %1340 = vmatpush1.msra.mxu0 0.0
    %1341 = vmatprep.subr.mxu0 0.0
    %1342 = vmatpush1.msra.mxu0 0.0
    %1343 = vmatprep.subr.mxu0 0.0
    %1344 = vmatpush1.msra.mxu0 0.0
    %1345 = vmatprep.subr.mxu0 0.0
    %1346 = vmatpush1.msra.mxu0 0.0
    %1347 = vmatprep.subr.mxu0 0.0
    %1348 = vmatpush1.msra.mxu0 0.0
    %1349 = vmatprep.subr.mxu0 0.0
    %1350 = vmatpush1.msra.mxu0 0.0
    %1351 = vmatprep.subr.mxu0 0.0
    %1352 = vmatpush1.msra.mxu0 0.0
    %1353 = vmatprep.subr.mxu0 0.0
    %1354 = vmatpush1.msra.mxu0 0.0
    %1355 = vmatprep.subr.mxu0 0.0
    %1356 = vmatpush1.msra.mxu0 0.0
    %1357 = vmatprep.subr.mxu0 0.0
    %1358 = vmatpush1.msra.mxu0 0.0
    %1359 = vmatprep.subr.mxu0 0.0
    %1360 = vmatpush1.msra.mxu0 0.0
    %1361 = vmatprep.mubr.f32.mxu0 0.0
    %v1362 = vand.u32 %v795, 4294901760
    %1363 = vmatmul.mubr.f32.gmra.mrb[0].mxu0 %v1362
    %v1364 = vpop.f32.mrb[0].mxu0
    %v1365 = vadd.f32 %v1246, %v1364
    %v1366 = vpop.f32.mrb[0].mxu0
    %1367 = vdwg.mxu0
    %1368 = vmatprep.subr.mxu0 0.0
    %v1369 = vand.u32 %v798, 4294901760
    %1370 = vmatpush1.msra.mxu0 %v1369
    %1371 = vmatprep.subr.mxu0 0.0
    %v1372 = vand.u32 %v799, 4294901760
    %1373 = vmatpush1.msra.mxu0 %v1372
    %1374 = vmatprep.subr.mxu0 0.0
    %v1375 = vand.u32 %v800, 4294901760
    %1376 = vmatpush1.msra.mxu0 %v1375
    %1377 = vmatprep.subr.mxu0 0.0
    %v1378 = vand.u32 %v801, 4294901760
    %1379 = vmatpush1.msra.mxu0 %v1378
    %1380 = vmatprep.subr.mxu0 0.0
    %v1381 = vand.u32 %v802, 4294901760
    %1382 = vmatpush1.msra.mxu0 %v1381
    %1383 = vmatprep.subr.mxu0 0.0
    %v1384 = vand.u32 %v803, 4294901760
    %1385 = vmatpush1.msra.mxu0 %v1384
    %1386 = vmatprep.subr.mxu0 0.0
    %v1387 = vand.u32 %v804, 4294901760
    %1388 = vmatpush1.msra.mxu0 %v1387
    %1389 = vmatprep.subr.mxu0 0.0
    %v1390 = vand.u32 %v805, 4294901760
    %1391 = vmatpush1.msra.mxu0 %v1390
    %1392 = vmatprep.subr.mxu0 0.0
    %v1393 = vand.u32 %v806, 4294901760
    %1394 = vmatpush1.msra.mxu0 %v1393
    %1395 = vmatprep.subr.mxu0 0.0
    %v1396 = vand.u32 %v807, 4294901760
    %1397 = vmatpush1.msra.mxu0 %v1396
    %1398 = vmatprep.subr.mxu0 0.0
    %v1399 = vand.u32 %v808, 4294901760
    %1400 = vmatpush1.msra.mxu0 %v1399
    %1401 = vmatprep.subr.mxu0 0.0
    %v1402 = vand.u32 %v809, 4294901760
    %1403 = vmatpush1.msra.mxu0 %v1402
    %1404 = vmatprep.subr.mxu0 0.0
    %v1405 = vand.u32 %v810, 4294901760
    %1406 = vmatpush1.msra.mxu0 %v1405
    %1407 = vmatprep.subr.mxu0 0.0
    %v1408 = vand.u32 %v811, 4294901760
    %1409 = vmatpush1.msra.mxu0 %v1408
    %1410 = vmatprep.subr.mxu0 0.0
    %v1411 = vand.u32 %v812, 4294901760
    %1412 = vmatpush1.msra.mxu0 %v1411
    %1413 = vmatprep.subr.mxu0 0.0
    %v1414 = vand.u32 %v813, 4294901760
    %1415 = vmatpush1.msra.mxu0 %v1414
    %1416 = vmatprep.subr.mxu0 0.0
    %1417 = vmatpush1.msra.mxu0 0.0
    %1418 = vmatprep.subr.mxu0 0.0
    %1419 = vmatpush1.msra.mxu0 0.0
    %1420 = vmatprep.subr.mxu0 0.0
    %1421 = vmatpush1.msra.mxu0 0.0
    %1422 = vmatprep.subr.mxu0 0.0
    %1423 = vmatpush1.msra.mxu0 0.0
    %1424 = vmatprep.subr.mxu0 0.0
    %1425 = vmatpush1.msra.mxu0 0.0
    %1426 = vmatprep.subr.mxu0 0.0
    %1427 = vmatpush1.msra.mxu0 0.0
    %1428 = vmatprep.subr.mxu0 0.0
    %1429 = vmatpush1.msra.mxu0 0.0
    %1430 = vmatprep.subr.mxu0 0.0
    %1431 = vmatpush1.msra.mxu0 0.0
    %1432 = vmatprep.subr.mxu0 0.0
    %1433 = vmatpush1.msra.mxu0 0.0
    %1434 = vmatprep.subr.mxu0 0.0
    %1435 = vmatpush1.msra.mxu0 0.0
    %1436 = vmatprep.subr.mxu0 0.0
    %1437 = vmatpush1.msra.mxu0 0.0
    %1438 = vmatprep.subr.mxu0 0.0
    %1439 = vmatpush1.msra.mxu0 0.0
    %1440 = vmatprep.subr.mxu0 0.0
    %1441 = vmatpush1.msra.mxu0 0.0
    %1442 = vmatprep.subr.mxu0 0.0
    %1443 = vmatpush1.msra.mxu0 0.0
    %1444 = vmatprep.subr.mxu0 0.0
    %1445 = vmatpush1.msra.mxu0 0.0
    %1446 = vmatprep.subr.mxu0 0.0
    %1447 = vmatpush1.msra.mxu0 0.0
    %1448 = vmatprep.mubr.f32.mxu0 0.0
    %v1449 = vand.u32 %v795, 4294901760
    %1450 = vmatmul.mubr.f32.gmra.mrb[0].mxu0 %v1449
    %v1451 = vpop.f32.mrb[0].mxu0
    %v1452 = vadd.f32 %v1365, %v1451
    %v1453 = vpop.f32.mrb[0].mxu0
    %1454 = vdwg.mxu0
    %v1455 = vtanh.pop %v1452
    %v1456 = vld [vmem:[#allocation6] sm:$0xff]
    %v1457 = vld [vmem:[#allocation6 + $0x8] sm:$0xff]
    %v1458 = vld [vmem:[#allocation6 + $0x10] sm:$0xff]
    %v1459 = vld [vmem:[#allocation6 + $0x18] sm:$0xff]
    %v1460 = vld [vmem:[#allocation6 + $0x20] sm:$0xff]
    %v1461 = vld [vmem:[#allocation6 + $0x28] sm:$0xff]
    %v1462 = vld [vmem:[#allocation6 + $0x30] sm:$0xff]
    %v1463 = vld [vmem:[#allocation6 + $0x38] sm:$0xff]
    %v1464 = vld [vmem:[#allocation6 + $0x40] sm:$0xff]
    %v1465 = vld [vmem:[#allocation6 + $0x48] sm:$0xff]
    %v1466 = vld [vmem:[#allocation6 + $0x50] sm:$0xff]
    %v1467 = vld [vmem:[#allocation6 + $0x58] sm:$0xff]
    %v1468 = vld [vmem:[#allocation6 + $0x60] sm:$0xff]
    %v1469 = vld [vmem:[#allocation6 + $0x68] sm:$0xff]
    %v1470 = vld [vmem:[#allocation6 + $0x70] sm:$0xff]
    %v1471 = vld [vmem:[#allocation6 + $0x78] sm:$0xff]
    %v1472 = vld [vmem:[%s4] sm:$0xff]
    %1473 = vmatprep.subr.mxu0 0.0
    %v1474 = vand.u32 %v1456, 4294901760
    %1475 = vmatpush1.msra.mxu0 %v1474
    %1476 = vmatprep.subr.mxu0 0.0
    %v1477 = vand.u32 %v1457, 4294901760
    %1478 = vmatpush1.msra.mxu0 %v1477
    %1479 = vmatprep.subr.mxu0 0.0
    %v1480 = vand.u32 %v1458, 4294901760
    %1481 = vmatpush1.msra.mxu0 %v1480
    %1482 = vmatprep.subr.mxu0 0.0
    %v1483 = vand.u32 %v1459, 4294901760
    %1484 = vmatpush1.msra.mxu0 %v1483
    %1485 = vmatprep.subr.mxu0 0.0
    %v1486 = vand.u32 %v1460, 4294901760
    %1487 = vmatpush1.msra.mxu0 %v1486
    %1488 = vmatprep.subr.mxu0 0.0
    %v1489 = vand.u32 %v1461, 4294901760
    %1490 = vmatpush1.msra.mxu0 %v1489
    %1491 = vmatprep.subr.mxu0 0.0
    %v1492 = vand.u32 %v1462, 4294901760
    %1493 = vmatpush1.msra.mxu0 %v1492
    %1494 = vmatprep.subr.mxu0 0.0
    %v1495 = vand.u32 %v1463, 4294901760
    %1496 = vmatpush1.msra.mxu0 %v1495
    %1497 = vmatprep.subr.mxu0 0.0
    %v1498 = vand.u32 %v1464, 4294901760
    %1499 = vmatpush1.msra.mxu0 %v1498
    %1500 = vmatprep.subr.mxu0 0.0
    %v1501 = vand.u32 %v1465, 4294901760
    %1502 = vmatpush1.msra.mxu0 %v1501
    %1503 = vmatprep.subr.mxu0 0.0
    %v1504 = vand.u32 %v1466, 4294901760
    %1505 = vmatpush1.msra.mxu0 %v1504
    %1506 = vmatprep.subr.mxu0 0.0
    %v1507 = vand.u32 %v1467, 4294901760
    %1508 = vmatpush1.msra.mxu0 %v1507
    %1509 = vmatprep.subr.mxu0 0.0
    %v1510 = vand.u32 %v1468, 4294901760
    %1511 = vmatpush1.msra.mxu0 %v1510
    %1512 = vmatprep.subr.mxu0 0.0
    %v1513 = vand.u32 %v1469, 4294901760
    %1514 = vmatpush1.msra.mxu0 %v1513
    %1515 = vmatprep.subr.mxu0 0.0
    %v1516 = vand.u32 %v1470, 4294901760
    %1517 = vmatpush1.msra.mxu0 %v1516
    %1518 = vmatprep.subr.mxu0 0.0
    %v1519 = vand.u32 %v1471, 4294901760
    %1520 = vmatpush1.msra.mxu0 %v1519
    %1521 = vmatprep.subr.mxu0 0.0
    %1522 = vmatpush1.msra.mxu0 0.0
    %1523 = vmatprep.subr.mxu0 0.0
    %1524 = vmatpush1.msra.mxu0 0.0
    %1525 = vmatprep.subr.mxu0 0.0
    %1526 = vmatpush1.msra.mxu0 0.0
    %1527 = vmatprep.subr.mxu0 0.0
    %1528 = vmatpush1.msra.mxu0 0.0
    %1529 = vmatprep.subr.mxu0 0.0
    %1530 = vmatpush1.msra.mxu0 0.0
    %1531 = vmatprep.subr.mxu0 0.0
    %1532 = vmatpush1.msra.mxu0 0.0
    %1533 = vmatprep.subr.mxu0 0.0
    %1534 = vmatpush1.msra.mxu0 0.0
    %1535 = vmatprep.subr.mxu0 0.0
    %1536 = vmatpush1.msra.mxu0 0.0
    %1537 = vmatprep.subr.mxu0 0.0
    %1538 = vmatpush1.msra.mxu0 0.0
    %1539 = vmatprep.subr.mxu0 0.0
    %1540 = vmatpush1.msra.mxu0 0.0
    %1541 = vmatprep.subr.mxu0 0.0
    %1542 = vmatpush1.msra.mxu0 0.0
    %1543 = vmatprep.subr.mxu0 0.0
    %1544 = vmatpush1.msra.mxu0 0.0
    %1545 = vmatprep.subr.mxu0 0.0
    %1546 = vmatpush1.msra.mxu0 0.0
    %1547 = vmatprep.subr.mxu0 0.0
    %1548 = vmatpush1.msra.mxu0 0.0
    %1549 = vmatprep.subr.mxu0 0.0
    %1550 = vmatpush1.msra.mxu0 0.0
    %1551 = vmatprep.subr.mxu0 0.0
    %1552 = vmatpush1.msra.mxu0 0.0
    %1553 = vmatprep.mubr.f32.mxu0 0.0
    %v1554 = vand.u32 %v1455, 4294901760
    %v1555 = vsub.f32 %v1455, %v1554
    %v1556 = vand.u32 %v1555, 4294901760
    %v1557 = vsub.f32 %v1555, %v1556
    %v1558 = vand.u32 %v1557, 4294901760
    %1559 = vmatmul.mubr.f32.gmra.mrb[0].mxu0 %v1558
    %v1560 = vpop.f32.mrb[0].mxu0
    %v1561 = vadd.f32 %v1472, %v1560
    %v1562 = vpop.f32.mrb[0].mxu0
    %1563 = vdwg.mxu0
    %1564 = vmatprep.subr.mxu0 0.0
    %v1565 = vand.u32 %v1456, 4294901760
    %v1566 = vsub.f32 %v1456, %v1565
    %v1567 = vand.u32 %v1566, 4294901760
    %v1568 = vsub.f32 %v1566, %v1567
    %v1569 = vand.u32 %v1568, 4294901760
    %1570 = vmatpush1.msra.mxu0 %v1569
    %1571 = vmatprep.subr.mxu0 0.0
    %v1572 = vand.u32 %v1457, 4294901760
    %v1573 = vsub.f32 %v1457, %v1572
    %v1574 = vand.u32 %v1573, 4294901760
    %v1575 = vsub.f32 %v1573, %v1574
    %v1576 = vand.u32 %v1575, 4294901760
    %1577 = vmatpush1.msra.mxu0 %v1576
    %1578 = vmatprep.subr.mxu0 0.0
    %v1579 = vand.u32 %v1458, 4294901760
    %v1580 = vsub.f32 %v1458, %v1579
    %v1581 = vand.u32 %v1580, 4294901760
    %v1582 = vsub.f32 %v1580, %v1581
    %v1583 = vand.u32 %v1582, 4294901760
    %1584 = vmatpush1.msra.mxu0 %v1583
    %1585 = vmatprep.subr.mxu0 0.0
    %v1586 = vand.u32 %v1459, 4294901760
    %v1587 = vsub.f32 %v1459, %v1586
    %v1588 = vand.u32 %v1587, 4294901760
    %v1589 = vsub.f32 %v1587, %v1588
    %v1590 = vand.u32 %v1589, 4294901760
    %1591 = vmatpush1.msra.mxu0 %v1590
    %1592 = vmatprep.subr.mxu0 0.0
    %v1593 = vand.u32 %v1460, 4294901760
    %v1594 = vsub.f32 %v1460, %v1593
    %v1595 = vand.u32 %v1594, 4294901760
    %v1596 = vsub.f32 %v1594, %v1595
    %v1597 = vand.u32 %v1596, 4294901760
    %1598 = vmatpush1.msra.mxu0 %v1597
    %1599 = vmatprep.subr.mxu0 0.0
    %v1600 = vand.u32 %v1461, 4294901760
    %v1601 = vsub.f32 %v1461, %v1600
    %v1602 = vand.u32 %v1601, 4294901760
    %v1603 = vsub.f32 %v1601, %v1602
    %v1604 = vand.u32 %v1603, 4294901760
    %1605 = vmatpush1.msra.mxu0 %v1604
    %1606 = vmatprep.subr.mxu0 0.0
    %v1607 = vand.u32 %v1462, 4294901760
    %v1608 = vsub.f32 %v1462, %v1607
    %v1609 = vand.u32 %v1608, 4294901760
    %v1610 = vsub.f32 %v1608, %v1609
    %v1611 = vand.u32 %v1610, 4294901760
    %1612 = vmatpush1.msra.mxu0 %v1611
    %1613 = vmatprep.subr.mxu0 0.0
    %v1614 = vand.u32 %v1463, 4294901760
    %v1615 = vsub.f32 %v1463, %v1614
    %v1616 = vand.u32 %v1615, 4294901760
    %v1617 = vsub.f32 %v1615, %v1616
    %v1618 = vand.u32 %v1617, 4294901760
    %1619 = vmatpush1.msra.mxu0 %v1618
    %1620 = vmatprep.subr.mxu0 0.0
    %v1621 = vand.u32 %v1464, 4294901760
    %v1622 = vsub.f32 %v1464, %v1621
    %v1623 = vand.u32 %v1622, 4294901760
    %v1624 = vsub.f32 %v1622, %v1623
    %v1625 = vand.u32 %v1624, 4294901760
    %1626 = vmatpush1.msra.mxu0 %v1625
    %1627 = vmatprep.subr.mxu0 0.0
    %v1628 = vand.u32 %v1465, 4294901760
    %v1629 = vsub.f32 %v1465, %v1628
    %v1630 = vand.u32 %v1629, 4294901760
    %v1631 = vsub.f32 %v1629, %v1630
    %v1632 = vand.u32 %v1631, 4294901760
    %1633 = vmatpush1.msra.mxu0 %v1632
    %1634 = vmatprep.subr.mxu0 0.0
    %v1635 = vand.u32 %v1466, 4294901760
    %v1636 = vsub.f32 %v1466, %v1635
    %v1637 = vand.u32 %v1636, 4294901760
    %v1638 = vsub.f32 %v1636, %v1637
    %v1639 = vand.u32 %v1638, 4294901760
    %1640 = vmatpush1.msra.mxu0 %v1639
    %1641 = vmatprep.subr.mxu0 0.0
    %v1642 = vand.u32 %v1467, 4294901760
    %v1643 = vsub.f32 %v1467, %v1642
    %v1644 = vand.u32 %v1643, 4294901760
    %v1645 = vsub.f32 %v1643, %v1644
    %v1646 = vand.u32 %v1645, 4294901760
    %1647 = vmatpush1.msra.mxu0 %v1646
    %1648 = vmatprep.subr.mxu0 0.0
    %v1649 = vand.u32 %v1468, 4294901760
    %v1650 = vsub.f32 %v1468, %v1649
    %v1651 = vand.u32 %v1650, 4294901760
    %v1652 = vsub.f32 %v1650, %v1651
    %v1653 = vand.u32 %v1652, 4294901760
    %1654 = vmatpush1.msra.mxu0 %v1653
    %1655 = vmatprep.subr.mxu0 0.0
    %v1656 = vand.u32 %v1469, 4294901760
    %v1657 = vsub.f32 %v1469, %v1656
    %v1658 = vand.u32 %v1657, 4294901760
    %v1659 = vsub.f32 %v1657, %v1658
    %v1660 = vand.u32 %v1659, 4294901760
    %1661 = vmatpush1.msra.mxu0 %v1660
    %1662 = vmatprep.subr.mxu0 0.0
    %v1663 = vand.u32 %v1470, 4294901760
    %v1664 = vsub.f32 %v1470, %v1663
    %v1665 = vand.u32 %v1664, 4294901760
    %v1666 = vsub.f32 %v1664, %v1665
    %v1667 = vand.u32 %v1666, 4294901760
    %1668 = vmatpush1.msra.mxu0 %v1667
    %1669 = vmatprep.subr.mxu0 0.0
    %v1670 = vand.u32 %v1471, 4294901760
    %v1671 = vsub.f32 %v1471, %v1670
    %v1672 = vand.u32 %v1671, 4294901760
    %v1673 = vsub.f32 %v1671, %v1672
    %v1674 = vand.u32 %v1673, 4294901760
    %1675 = vmatpush1.msra.mxu0 %v1674
    %1676 = vmatprep.subr.mxu0 0.0
    %1677 = vmatpush1.msra.mxu0 0.0
    %1678 = vmatprep.subr.mxu0 0.0
    %1679 = vmatpush1.msra.mxu0 0.0
    %1680 = vmatprep.subr.mxu0 0.0
    %1681 = vmatpush1.msra.mxu0 0.0
    %1682 = vmatprep.subr.mxu0 0.0
    %1683 = vmatpush1.msra.mxu0 0.0
    %1684 = vmatprep.subr.mxu0 0.0
    %1685 = vmatpush1.msra.mxu0 0.0
    %1686 = vmatprep.subr.mxu0 0.0
    %1687 = vmatpush1.msra.mxu0 0.0
    %1688 = vmatprep.subr.mxu0 0.0
    %1689 = vmatpush1.msra.mxu0 0.0
    %1690 = vmatprep.subr.mxu0 0.0
    %1691 = vmatpush1.msra.mxu0 0.0
    %1692 = vmatprep.subr.mxu0 0.0
    %1693 = vmatpush1.msra.mxu0 0.0
    %1694 = vmatprep.subr.mxu0 0.0
    %1695 = vmatpush1.msra.mxu0 0.0
    %1696 = vmatprep.subr.mxu0 0.0
    %1697 = vmatpush1.msra.mxu0 0.0
    %1698 = vmatprep.subr.mxu0 0.0
    %1699 = vmatpush1.msra.mxu0 0.0
    %1700 = vmatprep.subr.mxu0 0.0
    %1701 = vmatpush1.msra.mxu0 0.0
    %1702 = vmatprep.subr.mxu0 0.0
    %1703 = vmatpush1.msra.mxu0 0.0
    %1704 = vmatprep.subr.mxu0 0.0
    %1705 = vmatpush1.msra.mxu0 0.0
    %1706 = vmatprep.subr.mxu0 0.0
    %1707 = vmatpush1.msra.mxu0 0.0
    %1708 = vmatprep.mubr.f32.mxu0 0.0
    %v1709 = vand.u32 %v1455, 4294901760
    %1710 = vmatmul.mubr.f32.gmra.mrb[0].mxu0 %v1709
    %v1711 = vpop.f32.mrb[0].mxu0
    %v1712 = vadd.f32 %v1561, %v1711
    %v1713 = vpop.f32.mrb[0].mxu0
    %1714 = vdwg.mxu0
    %1715 = vmatprep.subr.mxu0 0.0
    %v1716 = vand.u32 %v1456, 4294901760
    %v1717 = vsub.f32 %v1456, %v1716
    %1718 = vmatpush1.msra.mxu0 %v1717
    %1719 = vmatprep.subr.mxu0 0.0
    %v1720 = vand.u32 %v1457, 4294901760
    %v1721 = vsub.f32 %v1457, %v1720
    %1722 = vmatpush1.msra.mxu0 %v1721
    %1723 = vmatprep.subr.mxu0 0.0
    %v1724 = vand.u32 %v1458, 4294901760
    %v1725 = vsub.f32 %v1458, %v1724
    %1726 = vmatpush1.msra.mxu0 %v1725
    %1727 = vmatprep.subr.mxu0 0.0
    %v1728 = vand.u32 %v1459, 4294901760
    %v1729 = vsub.f32 %v1459, %v1728
    %1730 = vmatpush1.msra.mxu0 %v1729
    %1731 = vmatprep.subr.mxu0 0.0
    %v1732 = vand.u32 %v1460, 4294901760
    %v1733 = vsub.f32 %v1460, %v1732
    %1734 = vmatpush1.msra.mxu0 %v1733
    %1735 = vmatprep.subr.mxu0 0.0
    %v1736 = vand.u32 %v1461, 4294901760
    %v1737 = vsub.f32 %v1461, %v1736
    %1738 = vmatpush1.msra.mxu0 %v1737
    %1739 = vmatprep.subr.mxu0 0.0
    %v1740 = vand.u32 %v1462, 4294901760
    %v1741 = vsub.f32 %v1462, %v1740
    %1742 = vmatpush1.msra.mxu0 %v1741
    %1743 = vmatprep.subr.mxu0 0.0
    %v1744 = vand.u32 %v1463, 4294901760
    %v1745 = vsub.f32 %v1463, %v1744
    %1746 = vmatpush1.msra.mxu0 %v1745
    %1747 = vmatprep.subr.mxu0 0.0
    %v1748 = vand.u32 %v1464, 4294901760
    %v1749 = vsub.f32 %v1464, %v1748
    %1750 = vmatpush1.msra.mxu0 %v1749
    %1751 = vmatprep.subr.mxu0 0.0
    %v1752 = vand.u32 %v1465, 4294901760
    %v1753 = vsub.f32 %v1465, %v1752
    %1754 = vmatpush1.msra.mxu0 %v1753
    %1755 = vmatprep.subr.mxu0 0.0
    %v1756 = vand.u32 %v1466, 4294901760
    %v1757 = vsub.f32 %v1466, %v1756
    %1758 = vmatpush1.msra.mxu0 %v1757
    %1759 = vmatprep.subr.mxu0 0.0
    %v1760 = vand.u32 %v1467, 4294901760
    %v1761 = vsub.f32 %v1467, %v1760
    %1762 = vmatpush1.msra.mxu0 %v1761
    %1763 = vmatprep.subr.mxu0 0.0
    %v1764 = vand.u32 %v1468, 4294901760
    %v1765 = vsub.f32 %v1468, %v1764
    %1766 = vmatpush1.msra.mxu0 %v1765
    %1767 = vmatprep.subr.mxu0 0.0
    %v1768 = vand.u32 %v1469, 4294901760
    %v1769 = vsub.f32 %v1469, %v1768
    %1770 = vmatpush1.msra.mxu0 %v1769
    %1771 = vmatprep.subr.mxu0 0.0
    %v1772 = vand.u32 %v1470, 4294901760
    %v1773 = vsub.f32 %v1470, %v1772
    %1774 = vmatpush1.msra.mxu0 %v1773
    %1775 = vmatprep.subr.mxu0 0.0
    %v1776 = vand.u32 %v1471, 4294901760
    %v1777 = vsub.f32 %v1471, %v1776
    %1778 = vmatpush1.msra.mxu0 %v1777
    %1779 = vmatprep.subr.mxu0 0.0
    %1780 = vmatpush1.msra.mxu0 0.0
    %1781 = vmatprep.subr.mxu0 0.0
    %1782 = vmatpush1.msra.mxu0 0.0
    %1783 = vmatprep.subr.mxu0 0.0
    %1784 = vmatpush1.msra.mxu0 0.0
    %1785 = vmatprep.subr.mxu0 0.0
    %1786 = vmatpush1.msra.mxu0 0.0
    %1787 = vmatprep.subr.mxu0 0.0
    %1788 = vmatpush1.msra.mxu0 0.0
    %1789 = vmatprep.subr.mxu0 0.0
    %1790 = vmatpush1.msra.mxu0 0.0
    %1791 = vmatprep.subr.mxu0 0.0
    %1792 = vmatpush1.msra.mxu0 0.0
    %1793 = vmatprep.subr.mxu0 0.0
    %1794 = vmatpush1.msra.mxu0 0.0
    %1795 = vmatprep.subr.mxu0 0.0
    %1796 = vmatpush1.msra.mxu0 0.0
    %1797 = vmatprep.subr.mxu0 0.0
    %1798 = vmatpush1.msra.mxu0 0.0
    %1799 = vmatprep.subr.mxu0 0.0
    %1800 = vmatpush1.msra.mxu0 0.0
    %1801 = vmatprep.subr.mxu0 0.0
    %1802 = vmatpush1.msra.mxu0 0.0
    %1803 = vmatprep.subr.mxu0 0.0
    %1804 = vmatpush1.msra.mxu0 0.0
    %1805 = vmatprep.subr.mxu0 0.0
    %1806 = vmatpush1.msra.mxu0 0.0
    %1807 = vmatprep.subr.mxu0 0.0
    %1808 = vmatpush1.msra.mxu0 0.0
    %1809 = vmatprep.subr.mxu0 0.0
    %1810 = vmatpush1.msra.mxu0 0.0
    %1811 = vmatprep.mubr.f32.mxu0 0.0
    %v1812 = vand.u32 %v1455, 4294901760
    %v1813 = vsub.f32 %v1455, %v1812
    %1814 = vmatmul.mubr.f32.gmra.mrb[0].mxu0 %v1813
    %v1815 = vpop.f32.mrb[0].mxu0
    %v1816 = vadd.f32 %v1712, %v1815
    %v1817 = vpop.f32.mrb[0].mxu0
    %1818 = vdwg.mxu0
    %1819 = vmatprep.subr.mxu0 0.0
    %v1820 = vand.u32 %v1456, 4294901760
    %1821 = vmatpush1.msra.mxu0 %v1820
    %1822 = vmatprep.subr.mxu0 0.0
    %v1823 = vand.u32 %v1457, 4294901760
    %1824 = vmatpush1.msra.mxu0 %v1823
    %1825 = vmatprep.subr.mxu0 0.0
    %v1826 = vand.u32 %v1458, 4294901760
    %1827 = vmatpush1.msra.mxu0 %v1826
    %1828 = vmatprep.subr.mxu0 0.0
    %v1829 = vand.u32 %v1459, 4294901760
    %1830 = vmatpush1.msra.mxu0 %v1829
    %1831 = vmatprep.subr.mxu0 0.0
    %v1832 = vand.u32 %v1460, 4294901760
    %1833 = vmatpush1.msra.mxu0 %v1832
    %1834 = vmatprep.subr.mxu0 0.0
    %v1835 = vand.u32 %v1461, 4294901760
    %1836 = vmatpush1.msra.mxu0 %v1835
    %1837 = vmatprep.subr.mxu0 0.0
    %v1838 = vand.u32 %v1462, 4294901760
    %1839 = vmatpush1.msra.mxu0 %v1838
    %1840 = vmatprep.subr.mxu0 0.0
    %v1841 = vand.u32 %v1463, 4294901760
    %1842 = vmatpush1.msra.mxu0 %v1841
    %1843 = vmatprep.subr.mxu0 0.0
    %v1844 = vand.u32 %v1464, 4294901760
    %1845 = vmatpush1.msra.mxu0 %v1844
    %1846 = vmatprep.subr.mxu0 0.0
    %v1847 = vand.u32 %v1465, 4294901760
    %1848 = vmatpush1.msra.mxu0 %v1847
    %1849 = vmatprep.subr.mxu0 0.0
    %v1850 = vand.u32 %v1466, 4294901760
    %1851 = vmatpush1.msra.mxu0 %v1850
    %1852 = vmatprep.subr.mxu0 0.0
    %v1853 = vand.u32 %v1467, 4294901760
    %1854 = vmatpush1.msra.mxu0 %v1853
    %1855 = vmatprep.subr.mxu0 0.0
    %v1856 = vand.u32 %v1468, 4294901760
    %1857 = vmatpush1.msra.mxu0 %v1856
    %1858 = vmatprep.subr.mxu0 0.0
    %v1859 = vand.u32 %v1469, 4294901760
    %1860 = vmatpush1.msra.mxu0 %v1859
    %1861 = vmatprep.subr.mxu0 0.0
    %v1862 = vand.u32 %v1470, 4294901760
    %1863 = vmatpush1.msra.mxu0 %v1862
    %1864 = vmatprep.subr.mxu0 0.0
    %v1865 = vand.u32 %v1471, 4294901760
    %1866 = vmatpush1.msra.mxu0 %v1865
    %1867 = vmatprep.subr.mxu0 0.0
    %1868 = vmatpush1.msra.mxu0 0.0
    %1869 = vmatprep.subr.mxu0 0.0
    %1870 = vmatpush1.msra.mxu0 0.0
    %1871 = vmatprep.subr.mxu0 0.0
    %1872 = vmatpush1.msra.mxu0 0.0
    %1873 = vmatprep.subr.mxu0 0.0
    %1874 = vmatpush1.msra.mxu0 0.0
    %1875 = vmatprep.subr.mxu0 0.0
    %1876 = vmatpush1.msra.mxu0 0.0
    %1877 = vmatprep.subr.mxu0 0.0
    %1878 = vmatpush1.msra.mxu0 0.0
    %1879 = vmatprep.subr.mxu0 0.0
    %1880 = vmatpush1.msra.mxu0 0.0
    %1881 = vmatprep.subr.mxu0 0.0
    %1882 = vmatpush1.msra.mxu0 0.0
    %1883 = vmatprep.subr.mxu0 0.0
    %1884 = vmatpush1.msra.mxu0 0.0
    %1885 = vmatprep.subr.mxu0 0.0
    %1886 = vmatpush1.msra.mxu0 0.0
    %1887 = vmatprep.subr.mxu0 0.0
    %1888 = vmatpush1.msra.mxu0 0.0
    %1889 = vmatprep.subr.mxu0 0.0
    %1890 = vmatpush1.msra.mxu0 0.0
    %1891 = vmatprep.subr.mxu0 0.0
    %1892 = vmatpush1.msra.mxu0 0.0
    %1893 = vmatprep.subr.mxu0 0.0
    %1894 = vmatpush1.msra.mxu0 0.0
    %1895 = vmatprep.subr.mxu0 0.0
    %1896 = vmatpush1.msra.mxu0 0.0
    %1897 = vmatprep.subr.mxu0 0.0
    %1898 = vmatpush1.msra.mxu0 0.0
    %1899 = vmatprep.mubr.f32.mxu0 0.0
    %v1900 = vand.u32 %v1455, 4294901760
    %v1901 = vsub.f32 %v1455, %v1900
    %v1902 = vand.u32 %v1901, 4294901760
    %1903 = vmatmul.mubr.f32.gmra.mrb[0].mxu0 %v1902
    %v1904 = vpop.f32.mrb[0].mxu0
    %v1905 = vadd.f32 %v1816, %v1904
    %v1906 = vpop.f32.mrb[0].mxu0
    %1907 = vdwg.mxu0
    %1908 = vmatprep.subr.mxu0 0.0
    %v1909 = vand.u32 %v1456, 4294901760
    %v1910 = vsub.f32 %v1456, %v1909
    %v1911 = vand.u32 %v1910, 4294901760
    %1912 = vmatpush1.msra.mxu0 %v1911
    %1913 = vmatprep.subr.mxu0 0.0
    %v1914 = vand.u32 %v1457, 4294901760
    %v1915 = vsub.f32 %v1457, %v1914
    %v1916 = vand.u32 %v1915, 4294901760
    %1917 = vmatpush1.msra.mxu0 %v1916
    %1918 = vmatprep.subr.mxu0 0.0
    %v1919 = vand.u32 %v1458, 4294901760
    %v1920 = vsub.f32 %v1458, %v1919
    %v1921 = vand.u32 %v1920, 4294901760
    %1922 = vmatpush1.msra.mxu0 %v1921
    %1923 = vmatprep.subr.mxu0 0.0
    %v1924 = vand.u32 %v1459, 4294901760
    %v1925 = vsub.f32 %v1459, %v1924
    %v1926 = vand.u32 %v1925, 4294901760
    %1927 = vmatpush1.msra.mxu0 %v1926
    %1928 = vmatprep.subr.mxu0 0.0
    %v1929 = vand.u32 %v1460, 4294901760
    %v1930 = vsub.f32 %v1460, %v1929
    %v1931 = vand.u32 %v1930, 4294901760
    %1932 = vmatpush1.msra.mxu0 %v1931
    %1933 = vmatprep.subr.mxu0 0.0
    %v1934 = vand.u32 %v1461, 4294901760
    %v1935 = vsub.f32 %v1461, %v1934
    %v1936 = vand.u32 %v1935, 4294901760
    %1937 = vmatpush1.msra.mxu0 %v1936
    %1938 = vmatprep.subr.mxu0 0.0
    %v1939 = vand.u32 %v1462, 4294901760
    %v1940 = vsub.f32 %v1462, %v1939
    %v1941 = vand.u32 %v1940, 4294901760
    %1942 = vmatpush1.msra.mxu0 %v1941
    %1943 = vmatprep.subr.mxu0 0.0
    %v1944 = vand.u32 %v1463, 4294901760
    %v1945 = vsub.f32 %v1463, %v1944
    %v1946 = vand.u32 %v1945, 4294901760
    %1947 = vmatpush1.msra.mxu0 %v1946
    %1948 = vmatprep.subr.mxu0 0.0
    %v1949 = vand.u32 %v1464, 4294901760
    %v1950 = vsub.f32 %v1464, %v1949
    %v1951 = vand.u32 %v1950, 4294901760
    %1952 = vmatpush1.msra.mxu0 %v1951
    %1953 = vmatprep.subr.mxu0 0.0
    %v1954 = vand.u32 %v1465, 4294901760
    %v1955 = vsub.f32 %v1465, %v1954
    %v1956 = vand.u32 %v1955, 4294901760
    %1957 = vmatpush1.msra.mxu0 %v1956
    %1958 = vmatprep.subr.mxu0 0.0
    %v1959 = vand.u32 %v1466, 4294901760
    %v1960 = vsub.f32 %v1466, %v1959
    %v1961 = vand.u32 %v1960, 4294901760
    %1962 = vmatpush1.msra.mxu0 %v1961
    %1963 = vmatprep.subr.mxu0 0.0
    %v1964 = vand.u32 %v1467, 4294901760
    %v1965 = vsub.f32 %v1467, %v1964
    %v1966 = vand.u32 %v1965, 4294901760
    %1967 = vmatpush1.msra.mxu0 %v1966
    %1968 = vmatprep.subr.mxu0 0.0
    %v1969 = vand.u32 %v1468, 4294901760
    %v1970 = vsub.f32 %v1468, %v1969
    %v1971 = vand.u32 %v1970, 4294901760
    %1972 = vmatpush1.msra.mxu0 %v1971
    %1973 = vmatprep.subr.mxu0 0.0
    %v1974 = vand.u32 %v1469, 4294901760
    %v1975 = vsub.f32 %v1469, %v1974
    %v1976 = vand.u32 %v1975, 4294901760
    %1977 = vmatpush1.msra.mxu0 %v1976
    %1978 = vmatprep.subr.mxu0 0.0
    %v1979 = vand.u32 %v1470, 4294901760
    %v1980 = vsub.f32 %v1470, %v1979
    %v1981 = vand.u32 %v1980, 4294901760
    %1982 = vmatpush1.msra.mxu0 %v1981
    %1983 = vmatprep.subr.mxu0 0.0
    %v1984 = vand.u32 %v1471, 4294901760
    %v1985 = vsub.f32 %v1471, %v1984
    %v1986 = vand.u32 %v1985, 4294901760
    %1987 = vmatpush1.msra.mxu0 %v1986
    %1988 = vmatprep.subr.mxu0 0.0
    %1989 = vmatpush1.msra.mxu0 0.0
    %1990 = vmatprep.subr.mxu0 0.0
    %1991 = vmatpush1.msra.mxu0 0.0
    %1992 = vmatprep.subr.mxu0 0.0
    %1993 = vmatpush1.msra.mxu0 0.0
    %1994 = vmatprep.subr.mxu0 0.0
    %1995 = vmatpush1.msra.mxu0 0.0
    %1996 = vmatprep.subr.mxu0 0.0
    %1997 = vmatpush1.msra.mxu0 0.0
    %1998 = vmatprep.subr.mxu0 0.0
    %1999 = vmatpush1.msra.mxu0 0.0
    %2000 = vmatprep.subr.mxu0 0.0
    %2001 = vmatpush1.msra.mxu0 0.0
    %2002 = vmatprep.subr.mxu0 0.0
    %2003 = vmatpush1.msra.mxu0 0.0
    %2004 = vmatprep.subr.mxu0 0.0
    %2005 = vmatpush1.msra.mxu0 0.0
    %2006 = vmatprep.subr.mxu0 0.0
    %2007 = vmatpush1.msra.mxu0 0.0
    %2008 = vmatprep.subr.mxu0 0.0
    %2009 = vmatpush1.msra.mxu0 0.0
    %2010 = vmatprep.subr.mxu0 0.0
    %2011 = vmatpush1.msra.mxu0 0.0
    %2012 = vmatprep.subr.mxu0 0.0
    %2013 = vmatpush1.msra.mxu0 0.0
    %2014 = vmatprep.subr.mxu0 0.0
    %2015 = vmatpush1.msra.mxu0 0.0
    %2016 = vmatprep.subr.mxu0 0.0
    %2017 = vmatpush1.msra.mxu0 0.0
    %2018 = vmatprep.subr.mxu0 0.0
    %2019 = vmatpush1.msra.mxu0 0.0
    %2020 = vmatprep.mubr.f32.mxu0 0.0
    %v2021 = vand.u32 %v1455, 4294901760
    %2022 = vmatmul.mubr.f32.gmra.mrb[0].mxu0 %v2021
    %v2023 = vpop.f32.mrb[0].mxu0
    %v2024 = vadd.f32 %v1905, %v2023
    %v2025 = vpop.f32.mrb[0].mxu0
    %2026 = vdwg.mxu0
    %2027 = vmatprep.subr.mxu0 0.0
    %v2028 = vand.u32 %v1456, 4294901760
    %2029 = vmatpush1.msra.mxu0 %v2028
    %2030 = vmatprep.subr.mxu0 0.0
    %v2031 = vand.u32 %v1457, 4294901760
    %2032 = vmatpush1.msra.mxu0 %v2031
    %2033 = vmatprep.subr.mxu0 0.0
    %v2034 = vand.u32 %v1458, 4294901760
    %2035 = vmatpush1.msra.mxu0 %v2034
    %2036 = vmatprep.subr.mxu0 0.0
    %v2037 = vand.u32 %v1459, 4294901760
    %2038 = vmatpush1.msra.mxu0 %v2037
    %2039 = vmatprep.subr.mxu0 0.0
    %v2040 = vand.u32 %v1460, 4294901760
    %2041 = vmatpush1.msra.mxu0 %v2040
    %2042 = vmatprep.subr.mxu0 0.0
    %v2043 = vand.u32 %v1461, 4294901760
    %2044 = vmatpush1.msra.mxu0 %v2043
    %2045 = vmatprep.subr.mxu0 0.0
    %v2046 = vand.u32 %v1462, 4294901760
    %2047 = vmatpush1.msra.mxu0 %v2046
    %2048 = vmatprep.subr.mxu0 0.0
    %v2049 = vand.u32 %v1463, 4294901760
    %2050 = vmatpush1.msra.mxu0 %v2049
    %2051 = vmatprep.subr.mxu0 0.0
    %v2052 = vand.u32 %v1464, 4294901760
    %2053 = vmatpush1.msra.mxu0 %v2052
    %2054 = vmatprep.subr.mxu0 0.0
    %v2055 = vand.u32 %v1465, 4294901760
    %2056 = vmatpush1.msra.mxu0 %v2055
    %2057 = vmatprep.subr.mxu0 0.0
    %v2058 = vand.u32 %v1466, 4294901760
    %2059 = vmatpush1.msra.mxu0 %v2058
    %2060 = vmatprep.subr.mxu0 0.0
    %v2061 = vand.u32 %v1467, 4294901760
    %2062 = vmatpush1.msra.mxu0 %v2061
    %2063 = vmatprep.subr.mxu0 0.0
    %v2064 = vand.u32 %v1468, 4294901760
    %2065 = vmatpush1.msra.mxu0 %v2064
    %2066 = vmatprep.subr.mxu0 0.0
    %v2067 = vand.u32 %v1469, 4294901760
    %2068 = vmatpush1.msra.mxu0 %v2067
    %2069 = vmatprep.subr.mxu0 0.0
    %v2070 = vand.u32 %v1470, 4294901760
    %2071 = vmatpush1.msra.mxu0 %v2070
    %2072 = vmatprep.subr.mxu0 0.0
    %v2073 = vand.u32 %v1471, 4294901760
    %2074 = vmatpush1.msra.mxu0 %v2073
    %2075 = vmatprep.subr.mxu0 0.0
    %2076 = vmatpush1.msra.mxu0 0.0
    %2077 = vmatprep.subr.mxu0 0.0
    %2078 = vmatpush1.msra.mxu0 0.0
    %2079 = vmatprep.subr.mxu0 0.0
    %2080 = vmatpush1.msra.mxu0 0.0
    %2081 = vmatprep.subr.mxu0 0.0
    %2082 = vmatpush1.msra.mxu0 0.0
    %2083 = vmatprep.subr.mxu0 0.0
    %2084 = vmatpush1.msra.mxu0 0.0
    %2085 = vmatprep.subr.mxu0 0.0
    %2086 = vmatpush1.msra.mxu0 0.0
    %2087 = vmatprep.subr.mxu0 0.0
    %2088 = vmatpush1.msra.mxu0 0.0
    %2089 = vmatprep.subr.mxu0 0.0
    %2090 = vmatpush1.msra.mxu0 0.0
    %2091 = vmatprep.subr.mxu0 0.0
    %2092 = vmatpush1.msra.mxu0 0.0
    %2093 = vmatprep.subr.mxu0 0.0
    %2094 = vmatpush1.msra.mxu0 0.0
    %2095 = vmatprep.subr.mxu0 0.0
    %2096 = vmatpush1.msra.mxu0 0.0
    %2097 = vmatprep.subr.mxu0 0.0
    %2098 = vmatpush1.msra.mxu0 0.0
    %2099 = vmatprep.subr.mxu0 0.0
    %2100 = vmatpush1.msra.mxu0 0.0
    %2101 = vmatprep.subr.mxu0 0.0
    %2102 = vmatpush1.msra.mxu0 0.0
    %2103 = vmatprep.subr.mxu0 0.0
    %2104 = vmatpush1.msra.mxu0 0.0
    %2105 = vmatprep.subr.mxu0 0.0
    %2106 = vmatpush1.msra.mxu0 0.0
    %2107 = vmatprep.mubr.f32.mxu0 0.0
    %v2108 = vand.u32 %v1455, 4294901760
    %2109 = vmatmul.mubr.f32.gmra.mrb[0].mxu0 %v2108
    %v2110 = vpop.f32.mrb[0].mxu0
    %v2111 = vadd.f32 %v2024, %v2110
    %v2112 = vpop.f32.mrb[0].mxu0
    %2113 = vdwg.mxu0
    %v2114 = vmax.f32 %v2111, 0.0
    %v2115 = vld [vmem:[#allocation7] sm:$0xff]
    %v2116 = vld [vmem:[#allocation7 + $0x8] sm:$0xff]
    %v2117 = vld [vmem:[#allocation7 + $0x10] sm:$0xff]
    %v2118 = vld [vmem:[#allocation7 + $0x18] sm:$0xff]
    %v2119 = vld [vmem:[#allocation7 + $0x20] sm:$0xff]
    %v2120 = vld [vmem:[#allocation7 + $0x28] sm:$0xff]
    %v2121 = vld [vmem:[#allocation7 + $0x30] sm:$0xff]
    %v2122 = vld [vmem:[#allocation7 + $0x38] sm:$0xff]
    %v2123 = vld [vmem:[#allocation7 + $0x40] sm:$0xff]
    %v2124 = vld [vmem:[#allocation7 + $0x48] sm:$0xff]
    %v2125 = vld [vmem:[#allocation7 + $0x50] sm:$0xff]
    %v2126 = vld [vmem:[#allocation7 + $0x58] sm:$0xff]
    %v2127 = vld [vmem:[#allocation7 + $0x60] sm:$0xff]
    %v2128 = vld [vmem:[#allocation7 + $0x68] sm:$0xff]
    %v2129 = vld [vmem:[#allocation7 + $0x70] sm:$0xff]
    %v2130 = vld [vmem:[#allocation7 + $0x78] sm:$0xff]
    %v2131 = vld [vmem:[%s6] sm:$0xff]
    %2132 = vmatprep.subr.mxu0 0.0
    %v2133 = vand.u32 %v2115, 4294901760
    %2134 = vmatpush1.msra.mxu0 %v2133
    %2135 = vmatprep.subr.mxu0 0.0
    %v2136 = vand.u32 %v2116, 4294901760
    %2137 = vmatpush1.msra.mxu0 %v2136
    %2138 = vmatprep.subr.mxu0 0.0
    %v2139 = vand.u32 %v2117, 4294901760
    %2140 = vmatpush1.msra.mxu0 %v2139
    %2141 = vmatprep.subr.mxu0 0.0
    %v2142 = vand.u32 %v2118, 4294901760
    %2143 = vmatpush1.msra.mxu0 %v2142
    %2144 = vmatprep.subr.mxu0 0.0
    %v2145 = vand.u32 %v2119, 4294901760
    %2146 = vmatpush1.msra.mxu0 %v2145
    %2147 = vmatprep.subr.mxu0 0.0
    %v2148 = vand.u32 %v2120, 4294901760
    %2149 = vmatpush1.msra.mxu0 %v2148
    %2150 = vmatprep.subr.mxu0 0.0
    %v2151 = vand.u32 %v2121, 4294901760
    %2152 = vmatpush1.msra.mxu0 %v2151
    %2153 = vmatprep.subr.mxu0 0.0
    %v2154 = vand.u32 %v2122, 4294901760
    %2155 = vmatpush1.msra.mxu0 %v2154
    %2156 = vmatprep.subr.mxu0 0.0
    %v2157 = vand.u32 %v2123, 4294901760
    %2158 = vmatpush1.msra.mxu0 %v2157
    %2159 = vmatprep.subr.mxu0 0.0
    %v2160 = vand.u32 %v2124, 4294901760
    %2161 = vmatpush1.msra.mxu0 %v2160
    %2162 = vmatprep.subr.mxu0 0.0
    %v2163 = vand.u32 %v2125, 4294901760
    %2164 = vmatpush1.msra.mxu0 %v2163
    %2165 = vmatprep.subr.mxu0 0.0
    %v2166 = vand.u32 %v2126, 4294901760
    %2167 = vmatpush1.msra.mxu0 %v2166
    %2168 = vmatprep.subr.mxu0 0.0
    %v2169 = vand.u32 %v2127, 4294901760
    %2170 = vmatpush1.msra.mxu0 %v2169
    %2171 = vmatprep.subr.mxu0 0.0
    %v2172 = vand.u32 %v2128, 4294901760
    %2173 = vmatpush1.msra.mxu0 %v2172
    %2174 = vmatprep.subr.mxu0 0.0
    %v2175 = vand.u32 %v2129, 4294901760
    %2176 = vmatpush1.msra.mxu0 %v2175
    %2177 = vmatprep.subr.mxu0 0.0
    %v2178 = vand.u32 %v2130, 4294901760
    %2179 = vmatpush1.msra.mxu0 %v2178
    %2180 = vmatprep.subr.mxu0 0.0
    %2181 = vmatpush1.msra.mxu0 0.0
    %2182 = vmatprep.subr.mxu0 0.0
    %2183 = vmatpush1.msra.mxu0 0.0
    %2184 = vmatprep.subr.mxu0 0.0
    %2185 = vmatpush1.msra.mxu0 0.0
    %2186 = vmatprep.subr.mxu0 0.0
    %2187 = vmatpush1.msra.mxu0 0.0
    %2188 = vmatprep.subr.mxu0 0.0
    %2189 = vmatpush1.msra.mxu0 0.0
    %2190 = vmatprep.subr.mxu0 0.0
    %2191 = vmatpush1.msra.mxu0 0.0
    %2192 = vmatprep.subr.mxu0 0.0
    %2193 = vmatpush1.msra.mxu0 0.0
    %2194 = vmatprep.subr.mxu0 0.0
    %2195 = vmatpush1.msra.mxu0 0.0
    %2196 = vmatprep.subr.mxu0 0.0
    %2197 = vmatpush1.msra.mxu0 0.0
    %2198 = vmatprep.subr.mxu0 0.0
    %2199 = vmatpush1.msra.mxu0 0.0
    %2200 = vmatprep.subr.mxu0 0.0
    %2201 = vmatpush1.msra.mxu0 0.0
    %2202 = vmatprep.subr.mxu0 0.0
    %2203 = vmatpush1.msra.mxu0 0.0
    %2204 = vmatprep.subr.mxu0 0.0
    %2205 = vmatpush1.msra.mxu0 0.0
    %2206 = vmatprep.subr.mxu0 0.0
    %2207 = vmatpush1.msra.mxu0 0.0
    %2208 = vmatprep.subr.mxu0 0.0
    %2209 = vmatpush1.msra.mxu0 0.0
    %2210 = vmatprep.subr.mxu0 0.0
    %2211 = vmatpush1.msra.mxu0 0.0
    %2212 = vmatprep.mubr.f32.mxu0 0.0
    %v2213 = vand.u32 %v2114, 4294901760
    %v2214 = vsub.f32 %v2114, %v2213
    %v2215 = vand.u32 %v2214, 4294901760
    %v2216 = vsub.f32 %v2214, %v2215
    %v2217 = vand.u32 %v2216, 4294901760
    %2218 = vmatmul.mubr.f32.gmra.mrb[0].mxu0 %v2217
    %v2219 = vpop.f32.mrb[0].mxu0
    %v2220 = vadd.f32 %v2131, %v2219
    %v2221 = vpop.f32.mrb[0].mxu0
    %2222 = vdwg.mxu0
    %2223 = vmatprep.subr.mxu0 0.0
    %v2224 = vand.u32 %v2115, 4294901760
    %v2225 = vsub.f32 %v2115, %v2224
    %v2226 = vand.u32 %v2225, 4294901760
    %v2227 = vsub.f32 %v2225, %v2226
    %v2228 = vand.u32 %v2227, 4294901760
    %2229 = vmatpush1.msra.mxu0 %v2228
    %2230 = vmatprep.subr.mxu0 0.0
    %v2231 = vand.u32 %v2116, 4294901760
    %v2232 = vsub.f32 %v2116, %v2231
    %v2233 = vand.u32 %v2232, 4294901760
    %v2234 = vsub.f32 %v2232, %v2233
    %v2235 = vand.u32 %v2234, 4294901760
    %2236 = vmatpush1.msra.mxu0 %v2235
    %2237 = vmatprep.subr.mxu0 0.0
    %v2238 = vand.u32 %v2117, 4294901760
    %v2239 = vsub.f32 %v2117, %v2238
    %v2240 = vand.u32 %v2239, 4294901760
    %v2241 = vsub.f32 %v2239, %v2240
    %v2242 = vand.u32 %v2241, 4294901760
    %2243 = vmatpush1.msra.mxu0 %v2242
    %2244 = vmatprep.subr.mxu0 0.0
    %v2245 = vand.u32 %v2118, 4294901760
    %v2246 = vsub.f32 %v2118, %v2245
    %v2247 = vand.u32 %v2246, 4294901760
    %v2248 = vsub.f32 %v2246, %v2247
    %v2249 = vand.u32 %v2248, 4294901760
    %2250 = vmatpush1.msra.mxu0 %v2249
    %2251 = vmatprep.subr.mxu0 0.0
    %v2252 = vand.u32 %v2119, 4294901760
    %v2253 = vsub.f32 %v2119, %v2252
    %v2254 = vand.u32 %v2253, 4294901760
    %v2255 = vsub.f32 %v2253, %v2254
    %v2256 = vand.u32 %v2255, 4294901760
    %2257 = vmatpush1.msra.mxu0 %v2256
    %2258 = vmatprep.subr.mxu0 0.0
    %v2259 = vand.u32 %v2120, 4294901760
    %v2260 = vsub.f32 %v2120, %v2259
    %v2261 = vand.u32 %v2260, 4294901760
    %v2262 = vsub.f32 %v2260, %v2261
    %v2263 = vand.u32 %v2262, 4294901760
    %2264 = vmatpush1.msra.mxu0 %v2263
    %2265 = vmatprep.subr.mxu0 0.0
    %v2266 = vand.u32 %v2121, 4294901760
    %v2267 = vsub.f32 %v2121, %v2266
    %v2268 = vand.u32 %v2267, 4294901760
    %v2269 = vsub.f32 %v2267, %v2268
    %v2270 = vand.u32 %v2269, 4294901760
    %2271 = vmatpush1.msra.mxu0 %v2270
    %2272 = vmatprep.subr.mxu0 0.0
    %v2273 = vand.u32 %v2122, 4294901760
    %v2274 = vsub.f32 %v2122, %v2273
    %v2275 = vand.u32 %v2274, 4294901760
    %v2276 = vsub.f32 %v2274, %v2275
    %v2277 = vand.u32 %v2276, 4294901760
    %2278 = vmatpush1.msra.mxu0 %v2277
    %2279 = vmatprep.subr.mxu0 0.0
    %v2280 = vand.u32 %v2123, 4294901760
    %v2281 = vsub.f32 %v2123, %v2280
    %v2282 = vand.u32 %v2281, 4294901760
    %v2283 = vsub.f32 %v2281, %v2282
    %v2284 = vand.u32 %v2283, 4294901760
    %2285 = vmatpush1.msra.mxu0 %v2284
    %2286 = vmatprep.subr.mxu0 0.0
    %v2287 = vand.u32 %v2124, 4294901760
    %v2288 = vsub.f32 %v2124, %v2287
    %v2289 = vand.u32 %v2288, 4294901760
    %v2290 = vsub.f32 %v2288, %v2289
    %v2291 = vand.u32 %v2290, 4294901760
    %2292 = vmatpush1.msra.mxu0 %v2291
    %2293 = vmatprep.subr.mxu0 0.0
    %v2294 = vand.u32 %v2125, 4294901760
    %v2295 = vsub.f32 %v2125, %v2294
    %v2296 = vand.u32 %v2295, 4294901760
    %v2297 = vsub.f32 %v2295, %v2296
    %v2298 = vand.u32 %v2297, 4294901760
    %2299 = vmatpush1.msra.mxu0 %v2298
    %2300 = vmatprep.subr.mxu0 0.0
    %v2301 = vand.u32 %v2126, 4294901760
    %v2302 = vsub.f32 %v2126, %v2301
    %v2303 = vand.u32 %v2302, 4294901760
    %v2304 = vsub.f32 %v2302, %v2303
    %v2305 = vand.u32 %v2304, 4294901760
    %2306 = vmatpush1.msra.mxu0 %v2305
    %2307 = vmatprep.subr.mxu0 0.0
    %v2308 = vand.u32 %v2127, 4294901760
    %v2309 = vsub.f32 %v2127, %v2308
    %v2310 = vand.u32 %v2309, 4294901760
    %v2311 = vsub.f32 %v2309, %v2310
    %v2312 = vand.u32 %v2311, 4294901760
    %2313 = vmatpush1.msra.mxu0 %v2312
    %2314 = vmatprep.subr.mxu0 0.0
    %v2315 = vand.u32 %v2128, 4294901760
    %v2316 = vsub.f32 %v2128, %v2315
    %v2317 = vand.u32 %v2316, 4294901760
    %v2318 = vsub.f32 %v2316, %v2317
    %v2319 = vand.u32 %v2318, 4294901760
    %2320 = vmatpush1.msra.mxu0 %v2319
    %2321 = vmatprep.subr.mxu0 0.0
    %v2322 = vand.u32 %v2129, 4294901760
    %v2323 = vsub.f32 %v2129, %v2322
    %v2324 = vand.u32 %v2323, 4294901760
    %v2325 = vsub.f32 %v2323, %v2324
    %v2326 = vand.u32 %v2325, 4294901760
    %2327 = vmatpush1.msra.mxu0 %v2326
    %2328 = vmatprep.subr.mxu0 0.0
    %v2329 = vand.u32 %v2130, 4294901760
    %v2330 = vsub.f32 %v2130, %v2329
    %v2331 = vand.u32 %v2330, 4294901760
    %v2332 = vsub.f32 %v2330, %v2331
    %v2333 = vand.u32 %v2332, 4294901760
    %2334 = vmatpush1.msra.mxu0 %v2333
    %2335 = vmatprep.subr.mxu0 0.0
    %2336 = vmatpush1.msra.mxu0 0.0
    %2337 = vmatprep.subr.mxu0 0.0
    %2338 = vmatpush1.msra.mxu0 0.0
    %2339 = vmatprep.subr.mxu0 0.0
    %2340 = vmatpush1.msra.mxu0 0.0
    %2341 = vmatprep.subr.mxu0 0.0
    %2342 = vmatpush1.msra.mxu0 0.0
    %2343 = vmatprep.subr.mxu0 0.0
    %2344 = vmatpush1.msra.mxu0 0.0
    %2345 = vmatprep.subr.mxu0 0.0
    %2346 = vmatpush1.msra.mxu0 0.0
    %2347 = vmatprep.subr.mxu0 0.0
    %2348 = vmatpush1.msra.mxu0 0.0
    %2349 = vmatprep.subr.mxu0 0.0
    %2350 = vmatpush1.msra.mxu0 0.0
    %2351 = vmatprep.subr.mxu0 0.0
    %2352 = vmatpush1.msra.mxu0 0.0
    %2353 = vmatprep.subr.mxu0 0.0
    %2354 = vmatpush1.msra.mxu0 0.0
    %2355 = vmatprep.subr.mxu0 0.0
    %2356 = vmatpush1.msra.mxu0 0.0
    %2357 = vmatprep.subr.mxu0 0.0
    %2358 = vmatpush1.msra.mxu0 0.0
    %2359 = vmatprep.subr.mxu0 0.0
    %2360 = vmatpush1.msra.mxu0 0.0
    %2361 = vmatprep.subr.mxu0 0.0
    %2362 = vmatpush1.msra.mxu0 0.0
    %2363 = vmatprep.subr.mxu0 0.0
    %2364 = vmatpush1.msra.mxu0 0.0
    %2365 = vmatprep.subr.mxu0 0.0
    %2366 = vmatpush1.msra.mxu0 0.0
    %2367 = vmatprep.mubr.f32.mxu0 0.0
    %v2368 = vand.u32 %v2114, 4294901760
    %2369 = vmatmul.mubr.f32.gmra.mrb[0].mxu0 %v2368
    %v2370 = vpop.f32.mrb[0].mxu0
    %v2371 = vadd.f32 %v2220, %v2370
    %v2372 = vpop.f32.mrb[0].mxu0
    %2373 = vdwg.mxu0
    %2374 = vmatprep.subr.mxu0 0.0
    %v2375 = vand.u32 %v2115, 4294901760
    %v2376 = vsub.f32 %v2115, %v2375
    %2377 = vmatpush1.msra.mxu0 %v2376
    %2378 = vmatprep.subr.mxu0 0.0
    %v2379 = vand.u32 %v2116, 4294901760
    %v2380 = vsub.f32 %v2116, %v2379
    %2381 = vmatpush1.msra.mxu0 %v2380
    %2382 = vmatprep.subr.mxu0 0.0
    %v2383 = vand.u32 %v2117, 4294901760
    %v2384 = vsub.f32 %v2117, %v2383
    %2385 = vmatpush1.msra.mxu0 %v2384
    %2386 = vmatprep.subr.mxu0 0.0
    %v2387 = vand.u32 %v2118, 4294901760
    %v2388 = vsub.f32 %v2118, %v2387
    %2389 = vmatpush1.msra.mxu0 %v2388
    %2390 = vmatprep.subr.mxu0 0.0
    %v2391 = vand.u32 %v2119, 4294901760
    %v2392 = vsub.f32 %v2119, %v2391
    %2393 = vmatpush1.msra.mxu0 %v2392
    %2394 = vmatprep.subr.mxu0 0.0
    %v2395 = vand.u32 %v2120, 4294901760
    %v2396 = vsub.f32 %v2120, %v2395
    %2397 = vmatpush1.msra.mxu0 %v2396
    %2398 = vmatprep.subr.mxu0 0.0
    %v2399 = vand.u32 %v2121, 4294901760
    %v2400 = vsub.f32 %v2121, %v2399
    %2401 = vmatpush1.msra.mxu0 %v2400
    %2402 = vmatprep.subr.mxu0 0.0
    %v2403 = vand.u32 %v2122, 4294901760
    %v2404 = vsub.f32 %v2122, %v2403
    %2405 = vmatpush1.msra.mxu0 %v2404
    %2406 = vmatprep.subr.mxu0 0.0
    %v2407 = vand.u32 %v2123, 4294901760
    %v2408 = vsub.f32 %v2123, %v2407
    %2409 = vmatpush1.msra.mxu0 %v2408
    %2410 = vmatprep.subr.mxu0 0.0
    %v2411 = vand.u32 %v2124, 4294901760
    %v2412 = vsub.f32 %v2124, %v2411
    %2413 = vmatpush1.msra.mxu0 %v2412
    %2414 = vmatprep.subr.mxu0 0.0
    %v2415 = vand.u32 %v2125, 4294901760
    %v2416 = vsub.f32 %v2125, %v2415
    %2417 = vmatpush1.msra.mxu0 %v2416
    %2418 = vmatprep.subr.mxu0 0.0
    %v2419 = vand.u32 %v2126, 4294901760
    %v2420 = vsub.f32 %v2126, %v2419
    %2421 = vmatpush1.msra.mxu0 %v2420
    %2422 = vmatprep.subr.mxu0 0.0
    %v2423 = vand.u32 %v2127, 4294901760
    %v2424 = vsub.f32 %v2127, %v2423
    %2425 = vmatpush1.msra.mxu0 %v2424
    %2426 = vmatprep.subr.mxu0 0.0
    %v2427 = vand.u32 %v2128, 4294901760
    %v2428 = vsub.f32 %v2128, %v2427
    %2429 = vmatpush1.msra.mxu0 %v2428
    %2430 = vmatprep.subr.mxu0 0.0
    %v2431 = vand.u32 %v2129, 4294901760
    %v2432 = vsub.f32 %v2129, %v2431
    %2433 = vmatpush1.msra.mxu0 %v2432
    %2434 = vmatprep.subr.mxu0 0.0
    %v2435 = vand.u32 %v2130, 4294901760
    %v2436 = vsub.f32 %v2130, %v2435
    %2437 = vmatpush1.msra.mxu0 %v2436
    %2438 = vmatprep.subr.mxu0 0.0
    %2439 = vmatpush1.msra.mxu0 0.0
    %2440 = vmatprep.subr.mxu0 0.0
    %2441 = vmatpush1.msra.mxu0 0.0
    %2442 = vmatprep.subr.mxu0 0.0
    %2443 = vmatpush1.msra.mxu0 0.0
    %2444 = vmatprep.subr.mxu0 0.0
    %2445 = vmatpush1.msra.mxu0 0.0
    %2446 = vmatprep.subr.mxu0 0.0
    %2447 = vmatpush1.msra.mxu0 0.0
    %2448 = vmatprep.subr.mxu0 0.0
    %2449 = vmatpush1.msra.mxu0 0.0
    %2450 = vmatprep.subr.mxu0 0.0
    %2451 = vmatpush1.msra.mxu0 0.0
    %2452 = vmatprep.subr.mxu0 0.0
    %2453 = vmatpush1.msra.mxu0 0.0
    %2454 = vmatprep.subr.mxu0 0.0
    %2455 = vmatpush1.msra.mxu0 0.0
    %2456 = vmatprep.subr.mxu0 0.0
    %2457 = vmatpush1.msra.mxu0 0.0
    %2458 = vmatprep.subr.mxu0 0.0
    %2459 = vmatpush1.msra.mxu0 0.0
    %2460 = vmatprep.subr.mxu0 0.0
    %2461 = vmatpush1.msra.mxu0 0.0
    %2462 = vmatprep.subr.mxu0 0.0
    %2463 = vmatpush1.msra.mxu0 0.0
    %2464 = vmatprep.subr.mxu0 0.0
    %2465 = vmatpush1.msra.mxu0 0.0
    %2466 = vmatprep.subr.mxu0 0.0
    %2467 = vmatpush1.msra.mxu0 0.0
    %2468 = vmatprep.subr.mxu0 0.0
    %2469 = vmatpush1.msra.mxu0 0.0
    %2470 = vmatprep.mubr.f32.mxu0 0.0
    %v2471 = vand.u32 %v2114, 4294901760
    %v2472 = vsub.f32 %v2114, %v2471
    %2473 = vmatmul.mubr.f32.gmra.mrb[0].mxu0 %v2472
    %v2474 = vpop.f32.mrb[0].mxu0
    %v2475 = vadd.f32 %v2371, %v2474
    %v2476 = vpop.f32.mrb[0].mxu0
    %2477 = vdwg.mxu0
    %2478 = vmatprep.subr.mxu0 0.0
    %v2479 = vand.u32 %v2115, 4294901760
    %2480 = vmatpush1.msra.mxu0 %v2479
    %2481 = vmatprep.subr.mxu0 0.0
    %v2482 = vand.u32 %v2116, 4294901760
    %2483 = vmatpush1.msra.mxu0 %v2482
    %2484 = vmatprep.subr.mxu0 0.0
    %v2485 = vand.u32 %v2117, 4294901760
    %2486 = vmatpush1.msra.mxu0 %v2485
    %2487 = vmatprep.subr.mxu0 0.0
    %v2488 = vand.u32 %v2118, 4294901760
    %2489 = vmatpush1.msra.mxu0 %v2488
    %2490 = vmatprep.subr.mxu0 0.0
    %v2491 = vand.u32 %v2119, 4294901760
    %2492 = vmatpush1.msra.mxu0 %v2491
    %2493 = vmatprep.subr.mxu0 0.0
    %v2494 = vand.u32 %v2120, 4294901760
    %2495 = vmatpush1.msra.mxu0 %v2494
    %2496 = vmatprep.subr.mxu0 0.0
    %v2497 = vand.u32 %v2121, 4294901760
    %2498 = vmatpush1.msra.mxu0 %v2497
    %2499 = vmatprep.subr.mxu0 0.0
    %v2500 = vand.u32 %v2122, 4294901760
    %2501 = vmatpush1.msra.mxu0 %v2500
    %2502 = vmatprep.subr.mxu0 0.0
    %v2503 = vand.u32 %v2123, 4294901760
    %2504 = vmatpush1.msra.mxu0 %v2503
    %2505 = vmatprep.subr.mxu0 0.0
    %v2506 = vand.u32 %v2124, 4294901760
    %2507 = vmatpush1.msra.mxu0 %v2506
    %2508 = vmatprep.subr.mxu0 0.0
    %v2509 = vand.u32 %v2125, 4294901760
    %2510 = vmatpush1.msra.mxu0 %v2509
    %2511 = vmatprep.subr.mxu0 0.0
    %v2512 = vand.u32 %v2126, 4294901760
    %2513 = vmatpush1.msra.mxu0 %v2512
    %2514 = vmatprep.subr.mxu0 0.0
    %v2515 = vand.u32 %v2127, 4294901760
    %2516 = vmatpush1.msra.mxu0 %v2515
    %2517 = vmatprep.subr.mxu0 0.0
    %v2518 = vand.u32 %v2128, 4294901760
    %2519 = vmatpush1.msra.mxu0 %v2518
    %2520 = vmatprep.subr.mxu0 0.0
    %v2521 = vand.u32 %v2129, 4294901760
    %2522 = vmatpush1.msra.mxu0 %v2521
    %2523 = vmatprep.subr.mxu0 0.0
    %v2524 = vand.u32 %v2130, 4294901760
    %2525 = vmatpush1.msra.mxu0 %v2524
    %2526 = vmatprep.subr.mxu0 0.0
    %2527 = vmatpush1.msra.mxu0 0.0
    %2528 = vmatprep.subr.mxu0 0.0
    %2529 = vmatpush1.msra.mxu0 0.0
    %2530 = vmatprep.subr.mxu0 0.0
    %2531 = vmatpush1.msra.mxu0 0.0
    %2532 = vmatprep.subr.mxu0 0.0
    %2533 = vmatpush1.msra.mxu0 0.0
    %2534 = vmatprep.subr.mxu0 0.0
    %2535 = vmatpush1.msra.mxu0 0.0
    %2536 = vmatprep.subr.mxu0 0.0
    %2537 = vmatpush1.msra.mxu0 0.0
    %2538 = vmatprep.subr.mxu0 0.0
    %2539 = vmatpush1.msra.mxu0 0.0
    %2540 = vmatprep.subr.mxu0 0.0
    %2541 = vmatpush1.msra.mxu0 0.0
    %2542 = vmatprep.subr.mxu0 0.0
    %2543 = vmatpush1.msra.mxu0 0.0
    %2544 = vmatprep.subr.mxu0 0.0
    %2545 = vmatpush1.msra.mxu0 0.0
    %2546 = vmatprep.subr.mxu0 0.0
    %2547 = vmatpush1.msra.mxu0 0.0
    %2548 = vmatprep.subr.mxu0 0.0
    %2549 = vmatpush1.msra.mxu0 0.0
    %2550 = vmatprep.subr.mxu0 0.0
    %2551 = vmatpush1.msra.mxu0 0.0
    %2552 = vmatprep.subr.mxu0 0.0
    %2553 = vmatpush1.msra.mxu0 0.0
    %2554 = vmatprep.subr.mxu0 0.0
    %2555 = vmatpush1.msra.mxu0 0.0
    %2556 = vmatprep.subr.mxu0 0.0
    %2557 = vmatpush1.msra.mxu0 0.0
    %2558 = vmatprep.mubr.f32.mxu0 0.0
    %v2559 = vand.u32 %v2114, 4294901760
    %v2560 = vsub.f32 %v2114, %v2559
    %v2561 = vand.u32 %v2560, 4294901760
    %2562 = vmatmul.mubr.f32.gmra.mrb[0].mxu0 %v2561
    %v2563 = vpop.f32.mrb[0].mxu0
    %v2564 = vadd.f32 %v2475, %v2563
    %v2565 = vpop.f32.mrb[0].mxu0
    %2566 = vdwg.mxu0
    %2567 = vmatprep.subr.mxu0 0.0
    %v2568 = vand.u32 %v2115, 4294901760
    %v2569 = vsub.f32 %v2115, %v2568
    %v2570 = vand.u32 %v2569, 4294901760
    %2571 = vmatpush1.msra.mxu0 %v2570
    %2572 = vmatprep.subr.mxu0 0.0
    %v2573 = vand.u32 %v2116, 4294901760
    %v2574 = vsub.f32 %v2116, %v2573
    %v2575 = vand.u32 %v2574, 4294901760
    %2576 = vmatpush1.msra.mxu0 %v2575
    %2577 = vmatprep.subr.mxu0 0.0
    %v2578 = vand.u32 %v2117, 4294901760
    %v2579 = vsub.f32 %v2117, %v2578
    %v2580 = vand.u32 %v2579, 4294901760
    %2581 = vmatpush1.msra.mxu0 %v2580
    %2582 = vmatprep.subr.mxu0 0.0
    %v2583 = vand.u32 %v2118, 4294901760
    %v2584 = vsub.f32 %v2118, %v2583
    %v2585 = vand.u32 %v2584, 4294901760
    %2586 = vmatpush1.msra.mxu0 %v2585
    %2587 = vmatprep.subr.mxu0 0.0
    %v2588 = vand.u32 %v2119, 4294901760
    %v2589 = vsub.f32 %v2119, %v2588
    %v2590 = vand.u32 %v2589, 4294901760
    %2591 = vmatpush1.msra.mxu0 %v2590
    %2592 = vmatprep.subr.mxu0 0.0
    %v2593 = vand.u32 %v2120, 4294901760
    %v2594 = vsub.f32 %v2120, %v2593
    %v2595 = vand.u32 %v2594, 4294901760
    %2596 = vmatpush1.msra.mxu0 %v2595
    %2597 = vmatprep.subr.mxu0 0.0
    %v2598 = vand.u32 %v2121, 4294901760
    %v2599 = vsub.f32 %v2121, %v2598
    %v2600 = vand.u32 %v2599, 4294901760
    %2601 = vmatpush1.msra.mxu0 %v2600
    %2602 = vmatprep.subr.mxu0 0.0
    %v2603 = vand.u32 %v2122, 4294901760
    %v2604 = vsub.f32 %v2122, %v2603
    %v2605 = vand.u32 %v2604, 4294901760
    %2606 = vmatpush1.msra.mxu0 %v2605
    %2607 = vmatprep.subr.mxu0 0.0
    %v2608 = vand.u32 %v2123, 4294901760
    %v2609 = vsub.f32 %v2123, %v2608
    %v2610 = vand.u32 %v2609, 4294901760
    %2611 = vmatpush1.msra.mxu0 %v2610
    %2612 = vmatprep.subr.mxu0 0.0
    %v2613 = vand.u32 %v2124, 4294901760
    %v2614 = vsub.f32 %v2124, %v2613
    %v2615 = vand.u32 %v2614, 4294901760
    %2616 = vmatpush1.msra.mxu0 %v2615
    %2617 = vmatprep.subr.mxu0 0.0
    %v2618 = vand.u32 %v2125, 4294901760
    %v2619 = vsub.f32 %v2125, %v2618
    %v2620 = vand.u32 %v2619, 4294901760
    %2621 = vmatpush1.msra.mxu0 %v2620
    %2622 = vmatprep.subr.mxu0 0.0
    %v2623 = vand.u32 %v2126, 4294901760
    %v2624 = vsub.f32 %v2126, %v2623
    %v2625 = vand.u32 %v2624, 4294901760
    %2626 = vmatpush1.msra.mxu0 %v2625
    %2627 = vmatprep.subr.mxu0 0.0
    %v2628 = vand.u32 %v2127, 4294901760
    %v2629 = vsub.f32 %v2127, %v2628
    %v2630 = vand.u32 %v2629, 4294901760
    %2631 = vmatpush1.msra.mxu0 %v2630
    %2632 = vmatprep.subr.mxu0 0.0
    %v2633 = vand.u32 %v2128, 4294901760
    %v2634 = vsub.f32 %v2128, %v2633
    %v2635 = vand.u32 %v2634, 4294901760
    %2636 = vmatpush1.msra.mxu0 %v2635
    %2637 = vmatprep.subr.mxu0 0.0
    %v2638 = vand.u32 %v2129, 4294901760
    %v2639 = vsub.f32 %v2129, %v2638
    %v2640 = vand.u32 %v2639, 4294901760
    %2641 = vmatpush1.msra.mxu0 %v2640
    %2642 = vmatprep.subr.mxu0 0.0
    %v2643 = vand.u32 %v2130, 4294901760
    %v2644 = vsub.f32 %v2130, %v2643
    %v2645 = vand.u32 %v2644, 4294901760
    %2646 = vmatpush1.msra.mxu0 %v2645
    %2647 = vmatprep.subr.mxu0 0.0
    %2648 = vmatpush1.msra.mxu0 0.0
    %2649 = vmatprep.subr.mxu0 0.0
    %2650 = vmatpush1.msra.mxu0 0.0
    %2651 = vmatprep.subr.mxu0 0.0
    %2652 = vmatpush1.msra.mxu0 0.0
    %2653 = vmatprep.subr.mxu0 0.0
    %2654 = vmatpush1.msra.mxu0 0.0
    %2655 = vmatprep.subr.mxu0 0.0
    %2656 = vmatpush1.msra.mxu0 0.0
    %2657 = vmatprep.subr.mxu0 0.0
    %2658 = vmatpush1.msra.mxu0 0.0
    %2659 = vmatprep.subr.mxu0 0.0
    %2660 = vmatpush1.msra.mxu0 0.0
    %2661 = vmatprep.subr.mxu0 0.0
    %2662 = vmatpush1.msra.mxu0 0.0
    %2663 = vmatprep.subr.mxu0 0.0
    %2664 = vmatpush1.msra.mxu0 0.0
    %2665 = vmatprep.subr.mxu0 0.0
    %2666 = vmatpush1.msra.mxu0 0.0
    %2667 = vmatprep.subr.mxu0 0.0
    %2668 = vmatpush1.msra.mxu0 0.0
    %2669 = vmatprep.subr.mxu0 0.0
    %2670 = vmatpush1.msra.mxu0 0.0
    %2671 = vmatprep.subr.mxu0 0.0
    %2672 = vmatpush1.msra.mxu0 0.0
    %2673 = vmatprep.subr.mxu0 0.0
    %2674 = vmatpush1.msra.mxu0 0.0
    %2675 = vmatprep.subr.mxu0 0.0
    %2676 = vmatpush1.msra.mxu0 0.0
    %2677 = vmatprep.subr.mxu0 0.0
    %2678 = vmatpush1.msra.mxu0 0.0
    %2679 = vmatprep.mubr.f32.mxu0 0.0
    %v2680 = vand.u32 %v2114, 4294901760
    %2681 = vmatmul.mubr.f32.gmra.mrb[0].mxu0 %v2680
    %v2682 = vpop.f32.mrb[0].mxu0
    %v2683 = vadd.f32 %v2564, %v2682
    %v2684 = vpop.f32.mrb[0].mxu0
    %2685 = vdwg.mxu0
    %2686 = vmatprep.subr.mxu0 0.0
    %v2687 = vand.u32 %v2115, 4294901760
    %2688 = vmatpush1.msra.mxu0 %v2687
    %2689 = vmatprep.subr.mxu0 0.0
    %v2690 = vand.u32 %v2116, 4294901760
    %2691 = vmatpush1.msra.mxu0 %v2690
    %2692 = vmatprep.subr.mxu0 0.0
    %v2693 = vand.u32 %v2117, 4294901760
    %2694 = vmatpush1.msra.mxu0 %v2693
    %2695 = vmatprep.subr.mxu0 0.0
    %v2696 = vand.u32 %v2118, 4294901760
    %2697 = vmatpush1.msra.mxu0 %v2696
    %2698 = vmatprep.subr.mxu0 0.0
    %v2699 = vand.u32 %v2119, 4294901760
    %2700 = vmatpush1.msra.mxu0 %v2699
    %2701 = vmatprep.subr.mxu0 0.0
    %v2702 = vand.u32 %v2120, 4294901760
    %2703 = vmatpush1.msra.mxu0 %v2702
    %2704 = vmatprep.subr.mxu0 0.0
    %v2705 = vand.u32 %v2121, 4294901760
    %2706 = vmatpush1.msra.mxu0 %v2705
    %2707 = vmatprep.subr.mxu0 0.0
    %v2708 = vand.u32 %v2122, 4294901760
    %2709 = vmatpush1.msra.mxu0 %v2708
    %2710 = vmatprep.subr.mxu0 0.0
    %v2711 = vand.u32 %v2123, 4294901760
    %2712 = vmatpush1.msra.mxu0 %v2711
    %2713 = vmatprep.subr.mxu0 0.0
    %v2714 = vand.u32 %v2124, 4294901760
    %2715 = vmatpush1.msra.mxu0 %v2714
    %2716 = vmatprep.subr.mxu0 0.0
    %v2717 = vand.u32 %v2125, 4294901760
    %2718 = vmatpush1.msra.mxu0 %v2717
    %2719 = vmatprep.subr.mxu0 0.0
    %v2720 = vand.u32 %v2126, 4294901760
    %2721 = vmatpush1.msra.mxu0 %v2720
    %2722 = vmatprep.subr.mxu0 0.0
    %v2723 = vand.u32 %v2127, 4294901760
    %2724 = vmatpush1.msra.mxu0 %v2723
    %2725 = vmatprep.subr.mxu0 0.0
    %v2726 = vand.u32 %v2128, 4294901760
    %2727 = vmatpush1.msra.mxu0 %v2726
    %2728 = vmatprep.subr.mxu0 0.0
    %v2729 = vand.u32 %v2129, 4294901760
    %2730 = vmatpush1.msra.mxu0 %v2729
    %2731 = vmatprep.subr.mxu0 0.0
    %v2732 = vand.u32 %v2130, 4294901760
    %2733 = vmatpush1.msra.mxu0 %v2732
    %2734 = vmatprep.subr.mxu0 0.0
    %2735 = vmatpush1.msra.mxu0 0.0
    %2736 = vmatprep.subr.mxu0 0.0
    %2737 = vmatpush1.msra.mxu0 0.0
    %2738 = vmatprep.subr.mxu0 0.0
    %2739 = vmatpush1.msra.mxu0 0.0
    %2740 = vmatprep.subr.mxu0 0.0
    %2741 = vmatpush1.msra.mxu0 0.0
    %2742 = vmatprep.subr.mxu0 0.0
    %2743 = vmatpush1.msra.mxu0 0.0
    %2744 = vmatprep.subr.mxu0 0.0
    %2745 = vmatpush1.msra.mxu0 0.0
    %2746 = vmatprep.subr.mxu0 0.0
    %2747 = vmatpush1.msra.mxu0 0.0
    %2748 = vmatprep.subr.mxu0 0.0
    %2749 = vmatpush1.msra.mxu0 0.0
    %2750 = vmatprep.subr.mxu0 0.0
    %2751 = vmatpush1.msra.mxu0 0.0
    %2752 = vmatprep.subr.mxu0 0.0
    %2753 = vmatpush1.msra.mxu0 0.0
    %2754 = vmatprep.subr.mxu0 0.0
    %2755 = vmatpush1.msra.mxu0 0.0
    %2756 = vmatprep.subr.mxu0 0.0
    %2757 = vmatpush1.msra.mxu0 0.0
    %2758 = vmatprep.subr.mxu0 0.0
    %2759 = vmatpush1.msra.mxu0 0.0
    %2760 = vmatprep.subr.mxu0 0.0
    %2761 = vmatpush1.msra.mxu0 0.0
    %2762 = vmatprep.subr.mxu0 0.0
    %2763 = vmatpush1.msra.mxu0 0.0
    %2764 = vmatprep.subr.mxu0 0.0
    %2765 = vmatpush1.msra.mxu0 0.0
    %2766 = vmatprep.mubr.f32.mxu0 0.0
    %v2767 = vand.u32 %v2114, 4294901760
    %2768 = vmatmul.mubr.f32.gmra.mrb[0].mxu0 %v2767
    %v2769 = vpop.f32.mrb[0].mxu0
    %v2770 = vadd.f32 %v2683, %v2769
    %v2771 = vpop.f32.mrb[0].mxu0
    %2772 = vdwg.mxu0
    %2773 = vst [vmem:[%s7] sm:$0xff] %v2770
    // Predicated region
    $region46: #{forward.1} parent=1 // pred_check
      _
    $region47: #{forward.1} parent=1 // pred_check_branch
      %2775 = sbr.rel (0) target = $region49
    $region48: #{forward.1} parent=1 // pred_region
      _
    $region49: #{forward.1} parent=1 // pred_fallthru
      _
    // Predicated region
    $region50: #{forward.1} parent=1 // pred_check
      _
    $region51: #{forward.1} parent=1 // pred_check_branch
      %2777 = sbr.rel (0) target = $region53
    $region52: #{forward.1} parent=1 // pred_region
      _
    $region53: #{forward.1} parent=1 // pred_fallthru
      _
    %2778 = vsyncpa [#allocation3], 1
    %2779 = vsyncpa [#allocation5], 1
    %2780 = vsyncpa [#allocation8], 1

</llo_original>
